<compile_context>
chip_gen: v7x
topology: tpu7x:2x2x1
jax: 0.10.0
libtpu: 0.0.40
codegen_flags: <defaults>
</compile_context>

<pallas_src>
import math
import functools

import jax
import jax.numpy as jnp
from jax import lax
from jax.experimental import pallas as pl
from jax.experimental.pallas import tpu as pltpu

# ----------------------------- small config ---------------------------------
VOCAB = 128
HIDDEN = 32
N_HEADS = 4
HEAD_DIM = HIDDEN // N_HEADS          # 8
INTER = 64
N_LAYERS = 2
SEQ = 8
EPS = 1e-6


# --------------------------- alibi slope helpers -----------------------------
def _get_interleave(n):
    def _get_interleave_power_of_2(n):
        start = 2 ** (-2 ** (-(math.log2(n) - 3)))
        ratio = start
        return [start * ratio ** i for i in range(n)]

    if math.log2(n).is_integer():
        return _get_interleave_power_of_2(n)
    closest = 2 ** math.floor(math.log2(n))
    return (_get_interleave_power_of_2(closest)
            + _get_interleave(2 * closest)[0::2][: n - closest])


def _get_alibi_slopes(total_num_heads: int):
    return jnp.asarray(_get_interleave(total_num_heads), dtype=jnp.float32)


# ------------------------------ fused kernel ---------------------------------
def _stack_kernel(x_ref, bias_ref, ln1_ref, wq_ref, wk_ref, wv_ref, wo_ref,
                  ln2_ref, wg_ref, wu_ref, wd_ref, lnf_ref, out_ref,
                  *, num_heads, head_dim, scale):
    """One grid step == one BaichuanLayer; hidden state carried in out_ref."""
    l = pl.program_id(0)

    @pl.when(l == 0)
    def _():
        out_ref[...] = x_ref[...]

    def rms(x, w3_ref):                       # x: [T, H] f32
        w = w3_ref[0].astype(jnp.float32)     # [1, H]
        var = jnp.mean(x * x, axis=-1, keepdims=True)
        return x * lax.rsqrt(var + EPS) * w

    x = out_ref[...].astype(jnp.float32)      # [T, H] carried hidden state

    # ---------------- self-attention block ----------------
    h = rms(x, ln1_ref)
    hb = h.astype(jnp.bfloat16)
    q = jnp.dot(hb, wq_ref[0], preferred_element_type=jnp.float32)   # [T, H]
    k = jnp.dot(hb, wk_ref[0], preferred_element_type=jnp.float32)
    v = jnp.dot(hb, wv_ref[0], preferred_element_type=jnp.float32)

    head_outs = []
    for hd in range(num_heads):               # static unroll; all heads in one call
        sl = slice(hd * head_dim, (hd + 1) * head_dim)
        qh = q[:, sl].astype(jnp.bfloat16)
        kh = k[:, sl].astype(jnp.bfloat16)
        vh = v[:, sl].astype(jnp.bfloat16)
        # q @ k^T via dot_general (contract last dims; no explicit transpose)
        s = lax.dot_general(qh, kh, (((1,), (1,)), ((), ())),
                            preferred_element_type=jnp.float32)
        s = s * scale + bias_ref[hd]          # precomputed ALiBi + causal mask
        m = jnp.max(s, axis=-1, keepdims=True)
        p = jnp.exp(s - m)
        p = p * pl.reciprocal(jnp.sum(p, axis=-1, keepdims=True), approx=True)
        head_outs.append(jnp.dot(p.astype(jnp.bfloat16), vh,
                                 preferred_element_type=jnp.float32))
    attn = jnp.concatenate(head_outs, axis=-1)                        # [T, H]
    x = x + jnp.dot(attn.astype(jnp.bfloat16), wo_ref[0],
                    preferred_element_type=jnp.float32)

    # ---------------- MLP block ----------------
    h = rms(x, ln2_ref)
    hb = h.astype(jnp.bfloat16)
    gate = jnp.dot(hb, wg_ref[0], preferred_element_type=jnp.float32)  # [T, I]
    up = jnp.dot(hb, wu_ref[0], preferred_element_type=jnp.float32)    # [T, I]
    act = gate * jax.nn.sigmoid(gate) * up                             # SiLU * up, f32
    x = x + jnp.dot(act.astype(jnp.bfloat16), wd_ref[0],
                    preferred_element_type=jnp.float32)

    out_ref[...] = x.astype(out_ref.dtype)

    @pl.when(l == pl.num_programs(0) - 1)
    def _():
        xf = out_ref[...].astype(jnp.float32)
        out_ref[...] = rms(xf, lnf_ref).astype(out_ref.dtype)


# --------------------------- parameter init ----------------------------------
def init_params(key):
    def nrm(k, shape):
        return 0.02 * jax.random.normal(k, shape, dtype=jnp.float32)

    keys = jax.random.split(key, 1 + 4 * N_LAYERS)
    embed = nrm(keys[0], (VOCAB, HIDDEN))

    ln1, ln2 = [], []
    wq, wk, wv, wo, wg, wu, wd = [], [], [], [], [], [], []
    for i in range(N_LAYERS):
        k0, k1, k2, k3 = keys[1 + 4 * i: 1 + 4 * (i + 1)]
        w_pack = nrm(k0, (HIDDEN, 3 * HIDDEN))        # ColumnParallelLinear, bias=False
        gate_up = nrm(k2, (HIDDEN, 2 * INTER))        # ColumnParallelLinear
        ln1.append(jnp.ones((HIDDEN,), jnp.float32))
        ln2.append(jnp.ones((HIDDEN,), jnp.float32))
        # Column-split W_pack == qkv.chunk(3, dim=-1); gate_up split == SiluAndMul split.
        wq.append(w_pack[:, :HIDDEN])
        wk.append(w_pack[:, HIDDEN:2 * HIDDEN])
        wv.append(w_pack[:, 2 * HIDDEN:])
        wo.append(nrm(k1, (HIDDEN, HIDDEN)))          # RowParallelLinear
        wg.append(gate_up[:, :INTER])
        wu.append(gate_up[:, INTER:])
        wd.append(nrm(k3, (INTER, HIDDEN)))           # RowParallelLinear

    def stack_bf16(ws):
        return jnp.stack(ws).astype(jnp.bfloat16)     # MXU operands in bf16

    return {
        "embed": embed,
        "alibi_slopes": _get_alibi_slopes(N_HEADS),
        "ln1": jnp.stack(ln1)[:, None, :],            # [L, 1, H] f32
        "ln2": jnp.stack(ln2)[:, None, :],            # [L, 1, H] f32
        "lnf": jnp.ones((1, 1, HIDDEN), jnp.float32),
        "wq": stack_bf16(wq), "wk": stack_bf16(wk), "wv": stack_bf16(wv),
        "wo": stack_bf16(wo),                         # [L, H, H] bf16
        "wg": stack_bf16(wg), "wu": stack_bf16(wu),   # [L, H, I] bf16
        "wd": stack_bf16(wd),                         # [L, I, H] bf16
    }


# ------------------------------ forward pass ---------------------------------
def baichuan_forward(params, input_ids, positions):
    del positions  # ALiBi branch of BaichuanAttention does not use positions.
    T = input_ids.shape[0]

    # embedding gather (glue; not a hot-path matmul)
    x = jnp.take(params["embed"], input_ids, axis=0)            # [T, H] f32

    # ALiBi bias + causal mask, built once per forward (not per head / per call).
    row = lax.broadcasted_iota(jnp.int32, (T, T), 0)
    col = lax.broadcasted_iota(jnp.int32, (T, T), 1)
    rel = (col - row).astype(jnp.float32)
    bias = jnp.where(col[None] <= row[None],
                     params["alibi_slopes"][:, None, None] * rel[None],
                     jnp.float32(-1e30))                        # [NH, T, T]

    kernel = functools.partial(_stack_kernel, num_heads=N_HEADS,
                               head_dim=HEAD_DIM, scale=HEAD_DIM ** -0.5)

    full2 = lambda l: (0, 0)
    full3 = lambda l: (0, 0, 0)
    layer3 = lambda l: (l, 0, 0)

    return pl.pallas_call(
        kernel,
        out_shape=jax.ShapeDtypeStruct((T, HIDDEN), jnp.float32),
        grid=(N_LAYERS,),
        in_specs=[
            pl.BlockSpec((T, HIDDEN), full2),                    # x (embeddings)
            pl.BlockSpec((N_HEADS, T, T), full3),                # alibi bias + mask
            pl.BlockSpec((1, 1, HIDDEN), layer3),                # input_layernorm
            pl.BlockSpec((1, HIDDEN, HIDDEN), layer3),           # wq
            pl.BlockSpec((1, HIDDEN, HIDDEN), layer3),           # wk
            pl.BlockSpec((1, HIDDEN, HIDDEN), layer3),           # wv
            pl.BlockSpec((1, HIDDEN, HIDDEN), layer3),           # o_proj
            pl.BlockSpec((1, 1, HIDDEN), layer3),                # post_attention_layernorm
            pl.BlockSpec((1, HIDDEN, INTER), layer3),            # gate_proj
            pl.BlockSpec((1, HIDDEN, INTER), layer3),            # up_proj
            pl.BlockSpec((1, INTER, HIDDEN), layer3),            # down_proj
            pl.BlockSpec((1, 1, HIDDEN), full3),                 # final norm
        ],
        out_specs=pl.BlockSpec((T, HIDDEN), full2),              # resident carry
        compiler_params=pltpu.CompilerParams(
            dimension_semantics=("arbitrary",)),                 # layer axis carries state
    )(x, bias, params["ln1"], params["wq"], params["wk"], params["wv"],
      params["wo"], params["ln2"], params["wg"], params["wu"], params["wd"],
      params["lnf"])


# ---------------------------------- main --------------------------------------
if __name__ == "__main__":
    key = jax.random.PRNGKey(0)
    pkey, ikey = jax.random.split(key)
    params = init_params(pkey)

    input_ids = jax.random.randint(ikey, (SEQ,), 0, VOCAB, dtype=jnp.int32)
    positions = jnp.arange(SEQ, dtype=jnp.int32)

    out = jax.jit(baichuan_forward)(params, input_ids, positions)
    out = jax.block_until_ready(out)
    assert out.shape == (SEQ, HIDDEN)
    print("KERNEL_OK")
</pallas_src>

<mosaic_0001>
module attributes {stable_mosaic.version = 11 : i64} {
  func.func @_stack_kernel(%arg0: i32, %arg1: memref<8x32xf32, #tpu.memory_space<vmem>>, %arg2: memref<4x8x8xf32, #tpu.memory_space<vmem>>, %arg3: memref<1x1x32xf32, #tpu.memory_space<vmem>>, %arg4: memref<1x32x32xbf16, #tpu.memory_space<vmem>>, %arg5: memref<1x32x32xbf16, #tpu.memory_space<vmem>>, %arg6: memref<1x32x32xbf16, #tpu.memory_space<vmem>>, %arg7: memref<1x32x32xbf16, #tpu.memory_space<vmem>>, %arg8: memref<1x1x32xf32, #tpu.memory_space<vmem>>, %arg9: memref<1x32x64xbf16, #tpu.memory_space<vmem>>, %arg10: memref<1x32x64xbf16, #tpu.memory_space<vmem>>, %arg11: memref<1x64x32xbf16, #tpu.memory_space<vmem>>, %arg12: memref<1x1x32xf32, #tpu.memory_space<vmem>>, %arg13: memref<8x32xf32, #tpu.memory_space<vmem>>) attributes {dimension_semantics = [#tpu.dimension_semantics<arbitrary>], iteration_bounds = array<i64: 2>, scalar_prefetch = 0 : i64, scratch_operands = 0 : i64, tpu.core_type = #tpu.core_type<tc>, window_params = [{pipeline_mode = #tpu.pipeline_mode<synchronous>, transform_indices = @transform_0, window_bounds = array<i64: 8, 32>}, {pipeline_mode = #tpu.pipeline_mode<synchronous>, transform_indices = @transform_1, window_bounds = array<i64: 4, 8, 8>}, {transform_indices = @transform_2, window_bounds = array<i64: 1, 1, 32>}, {transform_indices = @transform_3, window_bounds = array<i64: 1, 32, 32>}, {transform_indices = @transform_4, window_bounds = array<i64: 1, 32, 32>}, {transform_indices = @transform_5, window_bounds = array<i64: 1, 32, 32>}, {transform_indices = @transform_6, window_bounds = array<i64: 1, 32, 32>}, {transform_indices = @transform_7, window_bounds = array<i64: 1, 1, 32>}, {transform_indices = @transform_8, window_bounds = array<i64: 1, 32, 64>}, {transform_indices = @transform_9, window_bounds = array<i64: 1, 32, 64>}, {transform_indices = @transform_10, window_bounds = array<i64: 1, 64, 32>}, {pipeline_mode = #tpu.pipeline_mode<synchronous>, transform_indices = @transform_11, window_bounds = array<i64: 1, 1, 32>}, {pipeline_mode = #tpu.pipeline_mode<synchronous>, transform_indices = @transform_12, window_bounds = array<i64: 8, 32>}]} {
    %c0_i32 = arith.constant 0 : i32
    %0 = arith.cmpi eq, %arg0, %c0_i32 : i32
    %1 = arith.extui %0 : i1 to i32
    %c0_i32_0 = arith.constant 0 : i32
    %2 = arith.cmpi ne, %1, %c0_i32_0 : i32
    scf.if %2 {
      %c0_74 = arith.constant 0 : index
      %c0_75 = arith.constant 0 : index
      %167 = vector.load %arg1[%c0_74, %c0_75] : memref<8x32xf32, #tpu.memory_space<vmem>>, vector<8x32xf32>
      %c0_76 = arith.constant 0 : index
      %c0_77 = arith.constant 0 : index
      %168 = vector.load %arg13[%c0_76, %c0_77] : memref<8x32xf32, #tpu.memory_space<vmem>>, vector<8x32xf32>
      tpu.vector_store %arg13[%c0_76, %c0_77], %167 {strides = array<i32>} : memref<8x32xf32, #tpu.memory_space<vmem>>, vector<8x32xf32>,
    } else {
    }
    %c0 = arith.constant 0 : index
    %c0_1 = arith.constant 0 : index
    %3 = vector.load %arg13[%c0, %c0_1] : memref<8x32xf32, #tpu.memory_space<vmem>>, vector<8x32xf32>
    %c0_2 = arith.constant 0 : index
    %c0_3 = arith.constant 0 : index
    %c0_4 = arith.constant 0 : index
    %4 = vector.load %arg3[%c0_2, %c0_3, %c0_4] : memref<1x1x32xf32, #tpu.memory_space<vmem>>, vector<1x1x32xf32>
    %5 = vector.shape_cast %4 : vector<1x1x32xf32> to vector<1x32xf32>
    %6 = arith.mulf %3, %3 : vector<8x32xf32>
    %cst = arith.constant dense<0.000000e+00> : vector<8xf32>
    %7 = vector.multi_reduction <add>, %6, %cst [1] : vector<8x32xf32> to vector<8xf32>
    %8 = vector.shape_cast %7 : vector<8xf32> to vector<8x1xf32>
    %cst_5 = arith.constant 3.200000e+01 : f32
    %9 = vector.broadcast %cst_5 : f32 to vector<8x1xf32>
    %10 = arith.divf %8, %9 : vector<8x1xf32>
    %cst_6 = arith.constant 9.99999997E-7 : f32
    %11 = vector.broadcast %cst_6 : f32 to vector<8x1xf32>
    %12 = arith.addf %10, %11 : vector<8x1xf32>
    %13 = math.rsqrt %12 : vector<8x1xf32>
    %14 = vector.broadcast %13 : vector<8x1xf32> to vector<8x32xf32>
    %15 = arith.mulf %3, %14 : vector<8x32xf32>
    %16 = vector.broadcast %5 : vector<1x32xf32> to vector<8x32xf32>
    %17 = arith.mulf %15, %16 : vector<8x32xf32>
    %18 = arith.truncf %17 : vector<8x32xf32> to vector<8x32xbf16>
    %c0_7 = arith.constant 0 : index
    %c0_8 = arith.constant 0 : index
    %c0_9 = arith.constant 0 : index
    %19 = vector.load %arg4[%c0_7, %c0_8, %c0_9] : memref<1x32x32xbf16, #tpu.memory_space<vmem>>, vector<1x32x32xbf16>
    %20 = vector.shape_cast %19 : vector<1x32x32xbf16> to vector<32x32xbf16>
    %cst_10 = arith.constant dense<0.000000e+00> : vector<8x32xf32>
    %21 = tpu.matmul %18, %20, %cst_10 {dimension_numbers = #tpu.dot_dimension_numbers<[1], [0], [0], [1], [0, 0, 1, 1], [], []>} : vector<8x32xbf16>, vector<32x32xbf16>, vector<8x32xf32> -> vector<8x32xf32>
    %c0_11 = arith.constant 0 : index
    %c0_12 = arith.constant 0 : index
    %c0_13 = arith.constant 0 : index
    %22 = vector.load %arg5[%c0_11, %c0_12, %c0_13] : memref<1x32x32xbf16, #tpu.memory_space<vmem>>, vector<1x32x32xbf16>
    %23 = vector.shape_cast %22 : vector<1x32x32xbf16> to vector<32x32xbf16>
    %cst_14 = arith.constant dense<0.000000e+00> : vector<8x32xf32>
    %24 = tpu.matmul %18, %23, %cst_14 {dimension_numbers = #tpu.dot_dimension_numbers<[1], [0], [0], [1], [0, 0, 1, 1], [], []>} : vector<8x32xbf16>, vector<32x32xbf16>, vector<8x32xf32> -> vector<8x32xf32>
    %c0_15 = arith.constant 0 : index
    %c0_16 = arith.constant 0 : index
    %c0_17 = arith.constant 0 : index
    %25 = vector.load %arg6[%c0_15, %c0_16, %c0_17] : memref<1x32x32xbf16, #tpu.memory_space<vmem>>, vector<1x32x32xbf16>
    %26 = vector.shape_cast %25 : vector<1x32x32xbf16> to vector<32x32xbf16>
    %cst_18 = arith.constant dense<0.000000e+00> : vector<8x32xf32>
    %27 = tpu.matmul %18, %26, %cst_18 {dimension_numbers = #tpu.dot_dimension_numbers<[1], [0], [0], [1], [0, 0, 1, 1], [], []>} : vector<8x32xbf16>, vector<32x32xbf16>, vector<8x32xf32> -> vector<8x32xf32>
    %28 = vector.extract_strided_slice %21 {offsets = [0, 0], sizes = [8, 8], strides = [1, 1]} : vector<8x32xf32> to vector<8x8xf32>
    %29 = arith.truncf %28 : vector<8x8xf32> to vector<8x8xbf16>
    %30 = vector.extract_strided_slice %24 {offsets = [0, 0], sizes = [8, 8], strides = [1, 1]} : vector<8x32xf32> to vector<8x8xf32>
    %31 = arith.truncf %30 : vector<8x8xf32> to vector<8x8xbf16>
    %32 = vector.extract_strided_slice %27 {offsets = [0, 0], sizes = [8, 8], strides = [1, 1]} : vector<8x32xf32> to vector<8x8xf32>
    %33 = arith.truncf %32 : vector<8x8xf32> to vector<8x8xbf16>
    %cst_19 = arith.constant dense<0.000000e+00> : vector<8x8xf32>
    %34 = tpu.matmul %29, %31, %cst_19 {dimension_numbers = #tpu.dot_dimension_numbers<[1], [1], [0], [0], [0, 0, 1, 0], [], []>} : vector<8x8xbf16>, vector<8x8xbf16>, vector<8x8xf32> -> vector<8x8xf32>
    %cst_20 = arith.constant 0.353553385 : f32
    %35 = vector.broadcast %cst_20 : f32 to vector<8x8xf32>
    %36 = arith.mulf %34, %35 : vector<8x8xf32>
    %c0_21 = arith.constant 0 : index
    %c0_22 = arith.constant 0 : index
    %c0_23 = arith.constant 0 : index
    %37 = vector.load %arg2[%c0_21, %c0_22, %c0_23] : memref<4x8x8xf32, #tpu.memory_space<vmem>>, vector<1x8x8xf32>
    %38 = vector.shape_cast %37 : vector<1x8x8xf32> to vector<8x8xf32>
    %39 = arith.addf %36, %38 : vector<8x8xf32>
    %cst_24 = arith.constant dense<0xFF800000> : vector<8xf32>
    %40 = vector.multi_reduction <maximumf>, %39, %cst_24 [1] : vector<8x8xf32> to vector<8xf32>
    %41 = vector.shape_cast %40 : vector<8xf32> to vector<8x1xf32>
    %42 = vector.broadcast %41 : vector<8x1xf32> to vector<8x8xf32>
    %43 = arith.subf %39, %42 : vector<8x8xf32>
    %44 = math.exp %43 : vector<8x8xf32>
    %cst_25 = arith.constant dense<0.000000e+00> : vector<8xf32>
    %45 = vector.multi_reduction <add>, %44, %cst_25 [1] : vector<8x8xf32> to vector<8xf32>
    %46 = vector.shape_cast %45 : vector<8xf32> to vector<8x1xf32>
    %47 = tpu.reciprocal %46 {approx = true} : vector<8x1xf32> -> vector<8x1xf32>
    %48 = vector.broadcast %47 : vector<8x1xf32> to vector<8x8xf32>
    %49 = arith.mulf %44, %48 : vector<8x8xf32>
    %50 = arith.truncf %49 : vector<8x8xf32> to vector<8x8xbf16>
    %cst_26 = arith.constant dense<0.000000e+00> : vector<8x8xf32>
    %51 = tpu.matmul %50, %33, %cst_26 {dimension_numbers = #tpu.dot_dimension_numbers<[1], [0], [0], [1], [0, 0, 1, 1], [], []>} : vector<8x8xbf16>, vector<8x8xbf16>, vector<8x8xf32> -> vector<8x8xf32>
    %52 = vector.extract_strided_slice %21 {offsets = [0, 8], sizes = [8, 8], strides = [1, 1]} : vector<8x32xf32> to vector<8x8xf32>
    %53 = arith.truncf %52 : vector<8x8xf32> to vector<8x8xbf16>
    %54 = vector.extract_strided_slice %24 {offsets = [0, 8], sizes = [8, 8], strides = [1, 1]} : vector<8x32xf32> to vector<8x8xf32>
    %55 = arith.truncf %54 : vector<8x8xf32> to vector<8x8xbf16>
    %56 = vector.extract_strided_slice %27 {offsets = [0, 8], sizes = [8, 8], strides = [1, 1]} : vector<8x32xf32> to vector<8x8xf32>
    %57 = arith.truncf %56 : vector<8x8xf32> to vector<8x8xbf16>
    %cst_27 = arith.constant dense<0.000000e+00> : vector<8x8xf32>
    %58 = tpu.matmul %53, %55, %cst_27 {dimension_numbers = #tpu.dot_dimension_numbers<[1], [1], [0], [0], [0, 0, 1, 0], [], []>} : vector<8x8xbf16>, vector<8x8xbf16>, vector<8x8xf32> -> vector<8x8xf32>
    %cst_28 = arith.constant 0.353553385 : f32
    %59 = vector.broadcast %cst_28 : f32 to vector<8x8xf32>
    %60 = arith.mulf %58, %59 : vector<8x8xf32>
    %c1 = arith.constant 1 : index
    %c0_29 = arith.constant 0 : index
    %c0_30 = arith.constant 0 : index
    %61 = vector.load %arg2[%c1, %c0_29, %c0_30] : memref<4x8x8xf32, #tpu.memory_space<vmem>>, vector<1x8x8xf32>
    %62 = vector.shape_cast %61 : vector<1x8x8xf32> to vector<8x8xf32>
    %63 = arith.addf %60, %62 : vector<8x8xf32>
    %cst_31 = arith.constant dense<0xFF800000> : vector<8xf32>
    %64 = vector.multi_reduction <maximumf>, %63, %cst_31 [1] : vector<8x8xf32> to vector<8xf32>
    %65 = vector.shape_cast %64 : vector<8xf32> to vector<8x1xf32>
    %66 = vector.broadcast %65 : vector<8x1xf32> to vector<8x8xf32>
    %67 = arith.subf %63, %66 : vector<8x8xf32>
    %68 = math.exp %67 : vector<8x8xf32>
    %cst_32 = arith.constant dense<0.000000e+00> : vector<8xf32>
    %69 = vector.multi_reduction <add>, %68, %cst_32 [1] : vector<8x8xf32> to vector<8xf32>
    %70 = vector.shape_cast %69 : vector<8xf32> to vector<8x1xf32>
    %71 = tpu.reciprocal %70 {approx = true} : vector<8x1xf32> -> vector<8x1xf32>
    %72 = vector.broadcast %71 : vector<8x1xf32> to vector<8x8xf32>
    %73 = arith.mulf %68, %72 : vector<8x8xf32>
    %74 = arith.truncf %73 : vector<8x8xf32> to vector<8x8xbf16>
    %cst_33 = arith.constant dense<0.000000e+00> : vector<8x8xf32>
    %75 = tpu.matmul %74, %57, %cst_33 {dimension_numbers = #tpu.dot_dimension_numbers<[1], [0], [0], [1], [0, 0, 1, 1], [], []>} : vector<8x8xbf16>, vector<8x8xbf16>, vector<8x8xf32> -> vector<8x8xf32>
    %76 = vector.extract_strided_slice %21 {offsets = [0, 16], sizes = [8, 8], strides = [1, 1]} : vector<8x32xf32> to vector<8x8xf32>
    %77 = arith.truncf %76 : vector<8x8xf32> to vector<8x8xbf16>
    %78 = vector.extract_strided_slice %24 {offsets = [0, 16], sizes = [8, 8], strides = [1, 1]} : vector<8x32xf32> to vector<8x8xf32>
    %79 = arith.truncf %78 : vector<8x8xf32> to vector<8x8xbf16>
    %80 = vector.extract_strided_slice %27 {offsets = [0, 16], sizes = [8, 8], strides = [1, 1]} : vector<8x32xf32> to vector<8x8xf32>
    %81 = arith.truncf %80 : vector<8x8xf32> to vector<8x8xbf16>
    %cst_34 = arith.constant dense<0.000000e+00> : vector<8x8xf32>
    %82 = tpu.matmul %77, %79, %cst_34 {dimension_numbers = #tpu.dot_dimension_numbers<[1], [1], [0], [0], [0, 0, 1, 0], [], []>} : vector<8x8xbf16>, vector<8x8xbf16>, vector<8x8xf32> -> vector<8x8xf32>
    %cst_35 = arith.constant 0.353553385 : f32
    %83 = vector.broadcast %cst_35 : f32 to vector<8x8xf32>
    %84 = arith.mulf %82, %83 : vector<8x8xf32>
    %c2 = arith.constant 2 : index
    %c0_36 = arith.constant 0 : index
    %c0_37 = arith.constant 0 : index
    %85 = vector.load %arg2[%c2, %c0_36, %c0_37] : memref<4x8x8xf32, #tpu.memory_space<vmem>>, vector<1x8x8xf32>
    %86 = vector.shape_cast %85 : vector<1x8x8xf32> to vector<8x8xf32>
    %87 = arith.addf %84, %86 : vector<8x8xf32>
    %cst_38 = arith.constant dense<0xFF800000> : vector<8xf32>
    %88 = vector.multi_reduction <maximumf>, %87, %cst_38 [1] : vector<8x8xf32> to vector<8xf32>
    %89 = vector.shape_cast %88 : vector<8xf32> to vector<8x1xf32>
    %90 = vector.broadcast %89 : vector<8x1xf32> to vector<8x8xf32>
    %91 = arith.subf %87, %90 : vector<8x8xf32>
    %92 = math.exp %91 : vector<8x8xf32>
    %cst_39 = arith.constant dense<0.000000e+00> : vector<8xf32>
    %93 = vector.multi_reduction <add>, %92, %cst_39 [1] : vector<8x8xf32> to vector<8xf32>
    %94 = vector.shape_cast %93 : vector<8xf32> to vector<8x1xf32>
    %95 = tpu.reciprocal %94 {approx = true} : vector<8x1xf32> -> vector<8x1xf32>
    %96 = vector.broadcast %95 : vector<8x1xf32> to vector<8x8xf32>
    %97 = arith.mulf %92, %96 : vector<8x8xf32>
    %98 = arith.truncf %97 : vector<8x8xf32> to vector<8x8xbf16>
    %cst_40 = arith.constant dense<0.000000e+00> : vector<8x8xf32>
    %99 = tpu.matmul %98, %81, %cst_40 {dimension_numbers = #tpu.dot_dimension_numbers<[1], [0], [0], [1], [0, 0, 1, 1], [], []>} : vector<8x8xbf16>, vector<8x8xbf16>, vector<8x8xf32> -> vector<8x8xf32>
    %100 = vector.extract_strided_slice %21 {offsets = [0, 24], sizes = [8, 8], strides = [1, 1]} : vector<8x32xf32> to vector<8x8xf32>
    %101 = arith.truncf %100 : vector<8x8xf32> to vector<8x8xbf16>
    %102 = vector.extract_strided_slice %24 {offsets = [0, 24], sizes = [8, 8], strides = [1, 1]} : vector<8x32xf32> to vector<8x8xf32>
    %103 = arith.truncf %102 : vector<8x8xf32> to vector<8x8xbf16>
    %104 = vector.extract_strided_slice %27 {offsets = [0, 24], sizes = [8, 8], strides = [1, 1]} : vector<8x32xf32> to vector<8x8xf32>
    %105 = arith.truncf %104 : vector<8x8xf32> to vector<8x8xbf16>
    %cst_41 = arith.constant dense<0.000000e+00> : vector<8x8xf32>
    %106 = tpu.matmul %101, %103, %cst_41 {dimension_numbers = #tpu.dot_dimension_numbers<[1], [1], [0], [0], [0, 0, 1, 0], [], []>} : vector<8x8xbf16>, vector<8x8xbf16>, vector<8x8xf32> -> vector<8x8xf32>
    %cst_42 = arith.constant 0.353553385 : f32
    %107 = vector.broadcast %cst_42 : f32 to vector<8x8xf32>
    %108 = arith.mulf %106, %107 : vector<8x8xf32>
    %c3 = arith.constant 3 : index
    %c0_43 = arith.constant 0 : index
    %c0_44 = arith.constant 0 : index
    %109 = vector.load %arg2[%c3, %c0_43, %c0_44] : memref<4x8x8xf32, #tpu.memory_space<vmem>>, vector<1x8x8xf32>
    %110 = vector.shape_cast %109 : vector<1x8x8xf32> to vector<8x8xf32>
    %111 = arith.addf %108, %110 : vector<8x8xf32>
    %cst_45 = arith.constant dense<0xFF800000> : vector<8xf32>
    %112 = vector.multi_reduction <maximumf>, %111, %cst_45 [1] : vector<8x8xf32> to vector<8xf32>
    %113 = vector.shape_cast %112 : vector<8xf32> to vector<8x1xf32>
    %114 = vector.broadcast %113 : vector<8x1xf32> to vector<8x8xf32>
    %115 = arith.subf %111, %114 : vector<8x8xf32>
    %116 = math.exp %115 : vector<8x8xf32>
    %cst_46 = arith.constant dense<0.000000e+00> : vector<8xf32>
    %117 = vector.multi_reduction <add>, %116, %cst_46 [1] : vector<8x8xf32> to vector<8xf32>
    %118 = vector.shape_cast %117 : vector<8xf32> to vector<8x1xf32>
    %119 = tpu.reciprocal %118 {approx = true} : vector<8x1xf32> -> vector<8x1xf32>
    %120 = vector.broadcast %119 : vector<8x1xf32> to vector<8x8xf32>
    %121 = arith.mulf %116, %120 : vector<8x8xf32>
    %122 = arith.truncf %121 : vector<8x8xf32> to vector<8x8xbf16>
    %cst_47 = arith.constant dense<0.000000e+00> : vector<8x8xf32>
    %123 = tpu.matmul %122, %105, %cst_47 {dimension_numbers = #tpu.dot_dimension_numbers<[1], [0], [0], [1], [0, 0, 1, 1], [], []>} : vector<8x8xbf16>, vector<8x8xbf16>, vector<8x8xf32> -> vector<8x8xf32>
    %124 = tpu.concatenate %51, %75, %99, %123 in 1 : vector<8x8xf32>, vector<8x8xf32>, vector<8x8xf32>, vector<8x8xf32> -> vector<8x32xf32>
    %125 = arith.truncf %124 : vector<8x32xf32> to vector<8x32xbf16>
    %c0_48 = arith.constant 0 : index
    %c0_49 = arith.constant 0 : index
    %c0_50 = arith.constant 0 : index
    %126 = vector.load %arg7[%c0_48, %c0_49, %c0_50] : memref<1x32x32xbf16, #tpu.memory_space<vmem>>, vector<1x32x32xbf16>
    %127 = vector.shape_cast %126 : vector<1x32x32xbf16> to vector<32x32xbf16>
    %cst_51 = arith.constant dense<0.000000e+00> : vector<8x32xf32>
    %128 = tpu.matmul %125, %127, %cst_51 {dimension_numbers = #tpu.dot_dimension_numbers<[1], [0], [0], [1], [0, 0, 1, 1], [], []>} : vector<8x32xbf16>, vector<32x32xbf16>, vector<8x32xf32> -> vector<8x32xf32>
    %129 = arith.addf %3, %128 : vector<8x32xf32>
    %c0_52 = arith.constant 0 : index
    %c0_53 = arith.constant 0 : index
    %c0_54 = arith.constant 0 : index
    %130 = vector.load %arg8[%c0_52, %c0_53, %c0_54] : memref<1x1x32xf32, #tpu.memory_space<vmem>>, vector<1x1x32xf32>
    %131 = vector.shape_cast %130 : vector<1x1x32xf32> to vector<1x32xf32>
    %132 = arith.mulf %129, %129 : vector<8x32xf32>
    %cst_55 = arith.constant dense<0.000000e+00> : vector<8xf32>
    %133 = vector.multi_reduction <add>, %132, %cst_55 [1] : vector<8x32xf32> to vector<8xf32>
    %134 = vector.shape_cast %133 : vector<8xf32> to vector<8x1xf32>
    %cst_56 = arith.constant 3.200000e+01 : f32
    %135 = vector.broadcast %cst_56 : f32 to vector<8x1xf32>
    %136 = arith.divf %134, %135 : vector<8x1xf32>
    %cst_57 = arith.constant 9.99999997E-7 : f32
    %137 = vector.broadcast %cst_57 : f32 to vector<8x1xf32>
    %138 = arith.addf %136, %137 : vector<8x1xf32>
    %139 = math.rsqrt %138 : vector<8x1xf32>
    %140 = vector.broadcast %139 : vector<8x1xf32> to vector<8x32xf32>
    %141 = arith.mulf %129, %140 : vector<8x32xf32>
    %142 = vector.broadcast %131 : vector<1x32xf32> to vector<8x32xf32>
    %143 = arith.mulf %141, %142 : vector<8x32xf32>
    %144 = arith.truncf %143 : vector<8x32xf32> to vector<8x32xbf16>
    %c0_58 = arith.constant 0 : index
    %c0_59 = arith.constant 0 : index
    %c0_60 = arith.constant 0 : index
    %145 = vector.load %arg9[%c0_58, %c0_59, %c0_60] : memref<1x32x64xbf16, #tpu.memory_space<vmem>>, vector<1x32x64xbf16>
    %146 = vector.shape_cast %145 : vector<1x32x64xbf16> to vector<32x64xbf16>
    %cst_61 = arith.constant dense<0.000000e+00> : vector<8x64xf32>
    %147 = tpu.matmul %144, %146, %cst_61 {dimension_numbers = #tpu.dot_dimension_numbers<[1], [0], [0], [1], [0, 0, 1, 1], [], []>} : vector<8x32xbf16>, vector<32x64xbf16>, vector<8x64xf32> -> vector<8x64xf32>
    %c0_62 = arith.constant 0 : index
    %c0_63 = arith.constant 0 : index
    %c0_64 = arith.constant 0 : index
    %148 = vector.load %arg10[%c0_62, %c0_63, %c0_64] : memref<1x32x64xbf16, #tpu.memory_space<vmem>>, vector<1x32x64xbf16>
    %149 = vector.shape_cast %148 : vector<1x32x64xbf16> to vector<32x64xbf16>
    %cst_65 = arith.constant dense<0.000000e+00> : vector<8x64xf32>
    %150 = tpu.matmul %144, %149, %cst_65 {dimension_numbers = #tpu.dot_dimension_numbers<[1], [0], [0], [1], [0, 0, 1, 1], [], []>} : vector<8x32xbf16>, vector<32x64xbf16>, vector<8x64xf32> -> vector<8x64xf32>
    %151 = arith.negf %147 : vector<8x64xf32>
    %152 = math.exp %151 : vector<8x64xf32>
    %cst_66 = arith.constant 1.000000e+00 : f32
    %153 = vector.broadcast %cst_66 : f32 to vector<8x64xf32>
    %154 = arith.addf %153, %152 : vector<8x64xf32>
    %155 = arith.divf %153, %154 : vector<8x64xf32>
    %156 = arith.mulf %147, %155 : vector<8x64xf32>
    %157 = arith.mulf %156, %150 : vector<8x64xf32>
    %158 = arith.truncf %157 : vector<8x64xf32> to vector<8x64xbf16>
    %c0_67 = arith.constant 0 : index
    %c0_68 = arith.constant 0 : index
    %c0_69 = arith.constant 0 : index
    %159 = vector.load %arg11[%c0_67, %c0_68, %c0_69] : memref<1x64x32xbf16, #tpu.memory_space<vmem>>, vector<1x64x32xbf16>
    %160 = vector.shape_cast %159 : vector<1x64x32xbf16> to vector<64x32xbf16>
    %cst_70 = arith.constant dense<0.000000e+00> : vector<8x32xf32>
    %161 = tpu.matmul %158, %160, %cst_70 {dimension_numbers = #tpu.dot_dimension_numbers<[1], [0], [0], [1], [0, 0, 1, 1], [], []>} : vector<8x64xbf16>, vector<64x32xbf16>, vector<8x32xf32> -> vector<8x32xf32>
    %162 = arith.addf %129, %161 : vector<8x32xf32>
    %c0_71 = arith.constant 0 : index
    %c0_72 = arith.constant 0 : index
    %163 = vector.load %arg13[%c0_71, %c0_72] : memref<8x32xf32, #tpu.memory_space<vmem>>, vector<8x32xf32>
    tpu.vector_store %arg13[%c0_71, %c0_72], %162 {strides = array<i32>} : memref<8x32xf32, #tpu.memory_space<vmem>>, vector<8x32xf32>,
    %c1_i32 = arith.constant 1 : i32
    %164 = arith.cmpi eq, %arg0, %c1_i32 : i32
    %165 = arith.extui %164 : i1 to i32
    %c0_i32_73 = arith.constant 0 : i32
    %166 = arith.cmpi ne, %165, %c0_i32_73 : i32
    scf.if %166 {
      %c0_74 = arith.constant 0 : index
      %c0_75 = arith.constant 0 : index
      %167 = vector.load %arg13[%c0_74, %c0_75] : memref<8x32xf32, #tpu.memory_space<vmem>>, vector<8x32xf32>
      %c0_76 = arith.constant 0 : index
      %c0_77 = arith.constant 0 : index
      %c0_78 = arith.constant 0 : index
      %168 = vector.load %arg12[%c0_76, %c0_77, %c0_78] : memref<1x1x32xf32, #tpu.memory_space<vmem>>, vector<1x1x32xf32>
      %169 = vector.shape_cast %168 : vector<1x1x32xf32> to vector<1x32xf32>
      %170 = arith.mulf %167, %167 : vector<8x32xf32>
      %cst_79 = arith.constant dense<0.000000e+00> : vector<8xf32>
      %171 = vector.multi_reduction <add>, %170, %cst_79 [1] : vector<8x32xf32> to vector<8xf32>
      %172 = vector.shape_cast %171 : vector<8xf32> to vector<8x1xf32>
      %cst_80 = arith.constant 3.200000e+01 : f32
      %173 = vector.broadcast %cst_80 : f32 to vector<8x1xf32>
      %174 = arith.divf %172, %173 : vector<8x1xf32>
      %cst_81 = arith.constant 9.99999997E-7 : f32
      %175 = vector.broadcast %cst_81 : f32 to vector<8x1xf32>
      %176 = arith.addf %174, %175 : vector<8x1xf32>
      %177 = math.rsqrt %176 : vector<8x1xf32>
      %178 = vector.broadcast %177 : vector<8x1xf32> to vector<8x32xf32>
      %179 = arith.mulf %167, %178 : vector<8x32xf32>
      %180 = vector.broadcast %169 : vector<1x32xf32> to vector<8x32xf32>
      %181 = arith.mulf %179, %180 : vector<8x32xf32>
      %c0_82 = arith.constant 0 : index
      %c0_83 = arith.constant 0 : index
      %182 = vector.load %arg13[%c0_82, %c0_83] : memref<8x32xf32, #tpu.memory_space<vmem>>, vector<8x32xf32>
      tpu.vector_store %arg13[%c0_82, %c0_83], %181 {strides = array<i32>} : memref<8x32xf32, #tpu.memory_space<vmem>>, vector<8x32xf32>,
    } else {
    }
    return
  }
  func.func @transform_0(%arg0: i32) -> (i32, i32) {
    %c0_i32 = arith.constant 0 : i32
    %c0_i32_0 = arith.constant 0 : i32
    %c0_i32_1 = arith.constant 0 : i32
    return %c0_i32, %c0_i32_0 : i32, i32
  }
  func.func @transform_1(%arg0: i32) -> (i32, i32, i32) {
    %c0_i32 = arith.constant 0 : i32
    %c0_i32_0 = arith.constant 0 : i32
    %c0_i32_1 = arith.constant 0 : i32
    %c0_i32_2 = arith.constant 0 : i32
    return %c0_i32, %c0_i32_0, %c0_i32_1 : i32, i32, i32
  }
  func.func @transform_2(%arg0: i32) -> (i32, i32, i32) {
    %c0_i32 = arith.constant 0 : i32
    %c0_i32_0 = arith.constant 0 : i32
    %c0_i32_1 = arith.constant 0 : i32
    return %arg0, %c0_i32, %c0_i32_0 : i32, i32, i32
  }
  func.func @transform_3(%arg0: i32) -> (i32, i32, i32) {
    %c0_i32 = arith.constant 0 : i32
    %c0_i32_0 = arith.constant 0 : i32
    %c0_i32_1 = arith.constant 0 : i32
    return %arg0, %c0_i32, %c0_i32_0 : i32, i32, i32
  }
  func.func @transform_4(%arg0: i32) -> (i32, i32, i32) {
    %c0_i32 = arith.constant 0 : i32
    %c0_i32_0 = arith.constant 0 : i32
    %c0_i32_1 = arith.constant 0 : i32
    return %arg0, %c0_i32, %c0_i32_0 : i32, i32, i32
  }
  func.func @transform_5(%arg0: i32) -> (i32, i32, i32) {
    %c0_i32 = arith.constant 0 : i32
    %c0_i32_0 = arith.constant 0 : i32
    %c0_i32_1 = arith.constant 0 : i32
    return %arg0, %c0_i32, %c0_i32_0 : i32, i32, i32
  }
  func.func @transform_6(%arg0: i32) -> (i32, i32, i32) {
    %c0_i32 = arith.constant 0 : i32
    %c0_i32_0 = arith.constant 0 : i32
    %c0_i32_1 = arith.constant 0 : i32
    return %arg0, %c0_i32, %c0_i32_0 : i32, i32, i32
  }
  func.func @transform_7(%arg0: i32) -> (i32, i32, i32) {
    %c0_i32 = arith.constant 0 : i32
    %c0_i32_0 = arith.constant 0 : i32
    %c0_i32_1 = arith.constant 0 : i32
    return %arg0, %c0_i32, %c0_i32_0 : i32, i32, i32
  }
  func.func @transform_8(%arg0: i32) -> (i32, i32, i32) {
    %c0_i32 = arith.constant 0 : i32
    %c0_i32_0 = arith.constant 0 : i32
    %c0_i32_1 = arith.constant 0 : i32
    return %arg0, %c0_i32, %c0_i32_0 : i32, i32, i32
  }
  func.func @transform_9(%arg0: i32) -> (i32, i32, i32) {
    %c0_i32 = arith.constant 0 : i32
    %c0_i32_0 = arith.constant 0 : i32
    %c0_i32_1 = arith.constant 0 : i32
    return %arg0, %c0_i32, %c0_i32_0 : i32, i32, i32
  }
  func.func @transform_10(%arg0: i32) -> (i32, i32, i32) {
    %c0_i32 = arith.constant 0 : i32
    %c0_i32_0 = arith.constant 0 : i32
    %c0_i32_1 = arith.constant 0 : i32
    return %arg0, %c0_i32, %c0_i32_0 : i32, i32, i32
  }
  func.func @transform_11(%arg0: i32) -> (i32, i32, i32) {
    %c0_i32 = arith.constant 0 : i32
    %c0_i32_0 = arith.constant 0 : i32
    %c0_i32_1 = arith.constant 0 : i32
    %c0_i32_2 = arith.constant 0 : i32
    return %c0_i32, %c0_i32_0, %c0_i32_1 : i32, i32, i32
  }
  func.func @transform_12(%arg0: i32) -> (i32, i32) {
    %c0_i32 = arith.constant 0 : i32
    %c0_i32_0 = arith.constant 0 : i32
    %c0_i32_1 = arith.constant 0 : i32
    return %c0_i32, %c0_i32_0 : i32, i32
  }
}

</mosaic_0001>

<llo_original>
// kernel: baichuan_forward.1
$region0: #{baichuan_forward.1}
  #allocation0 [shape = 'u32[]', space=smem, size = 0x4, offset = 0x4, fixed_abs, tag = 'smem constant byte address 0x4 - core index']
  #allocation1 [shape = 'u32[144,128]{1,0:T(1,128)}', space=vmem, size = 0x12000, scoped, tag = 'internal scratch']
  %s0 = inlined_call_operand.vmem [shape: f32[8,32], index: 0, kind: input, shape index: {}]
  %s1 = inlined_call_operand.vmem [shape: f32[4,8,8], index: 1, kind: input, shape index: {}]
  %s2 = inlined_call_operand.vmem [shape: f32[2,1,32], index: 2, kind: input, shape index: {}]
  %s3 = inlined_call_operand.vmem [shape: bf16[2,32,32], index: 3, kind: input, shape index: {}]
  %s4 = inlined_call_operand.vmem [shape: bf16[2,32,32], index: 4, kind: input, shape index: {}]
  %s5 = inlined_call_operand.vmem [shape: bf16[2,32,32], index: 5, kind: input, shape index: {}]
  %s6 = inlined_call_operand.vmem [shape: bf16[2,32,32], index: 6, kind: input, shape index: {}]
  %s7 = inlined_call_operand.vmem [shape: f32[2,1,32], index: 7, kind: input, shape index: {}]
  %s8 = inlined_call_operand.vmem [shape: bf16[2,32,64], index: 8, kind: input, shape index: {}]
  %s9 = inlined_call_operand.vmem [shape: bf16[2,32,64], index: 9, kind: input, shape index: {}]
  %s10 = inlined_call_operand.vmem [shape: bf16[2,64,32], index: 10, kind: input, shape index: {}]
  %s11 = inlined_call_operand.vmem [shape: f32[1,1,32], index: 11, kind: input, shape index: {}]
  %s12 = inlined_call_operand.hbm [shape: f32[8,32], index: 12, kind: output, shape index: {}]
  %s13 = sld [smem:[#allocation0]]
  $region89: #{baichuan_forward.1} parent=0
    _
  %s15 = ssub.s32 1, %s13
  %s16 = scalar_select 0, %s15, %s13
  $region1: #{baichuan_forward.1} parent=0
    #allocation2 [shape = 'u8[4096]{0}', space=vmem, size = 0x1000, scoped, tag = 'output window, operand 0, single buffered']
    #allocation3 [shape = 's32[2]{0}', space=sflag, size = 0x8, scoped, tag = 'scoped memory for baichuan_forward.1']
    %17 = vsyncpa [#allocation3], 0
    loop: start=0, step=1, limit=4
    $region2: #{baichuan_forward.1} parent=1 // loop_pre_header
      _
    $region3: #{baichuan_forward.1} parent=1 // loop_header
      %s19 = sphi 0, %s23
      %p20 = scmp.ge.s32.totalorder %s19, 4
      %s27 = sphi 0, %s27
      %s29 = sphi 0, %s27
      %s30 = sphi 0, %s29
      %s44 = sphi 0, %s30
      %s48 = sphi 0, %s48
      %s50 = sphi 0, %s48
      %s51 = sphi 0, %s50
      %s65 = sphi 0, %s51
      %s71 = sphi 0, %s73
      %s74 = sphi 0, %s71
      %s75 = sphi 0, %s74
      %s91 = sphi 0, %s75
      %s97 = sphi 0, %s99
      %s100 = sphi 0, %s97
      %s101 = sphi 0, %s100
      %s117 = sphi 0, %s101
      %s123 = sphi 0, %s125
      %s126 = sphi 0, %s123
      %s127 = sphi 0, %s126
      %s143 = sphi 0, %s127
      %s149 = sphi 0, %s151
      %s152 = sphi 0, %s149
      %s153 = sphi 0, %s152
      %s169 = sphi 0, %s153
      %s175 = sphi 0, %s177
      %s178 = sphi 0, %s175
      %s179 = sphi 0, %s178
      %s195 = sphi 0, %s179
      %s201 = sphi 0, %s203
      %s204 = sphi 0, %s201
      %s205 = sphi 0, %s204
      %s221 = sphi 0, %s205
      %s227 = sphi 0, %s229
      %s230 = sphi 0, %s227
      %s231 = sphi 0, %s230
      %s247 = sphi 0, %s231
      %s253 = sphi 0, %s255
      %s256 = sphi 0, %s253
      %s257 = sphi 0, %s256
      %s273 = sphi 0, %s257
      %s279 = sphi 0, %s281
      %s282 = sphi 0, %s279
      %s283 = sphi 0, %s282
      %s299 = sphi 0, %s283
      %s303 = sphi 0, %s303
      %s305 = sphi 0, %s303
      %s306 = sphi 0, %s305
      %s320 = sphi 0, %s306
      %s324 = sphi 0, %s324
      %s326 = sphi 0, %s324
      %s327 = sphi 0, %s326
      %s341 = sphi 0, %s327
    $region4: #{baichuan_forward.1} parent=1 // loop_header_branch
      %22 = sbr.rel (%p20) target = $region8
    $region5: #{baichuan_forward.1} parent=1 // loop_body
      %s24 = ssub.s32 %s19, 1
      %s25 = ssub.s32 %s19, 2
      %s26 = sadd.s32 %s19, 1
      %s28 = sadd.s32 %s27, 1
      %p31 = scmp.eq.s32.totalorder %s19, 1
      %p32 = scmp.ne.s32.totalorder %s27, %s29
      %p33 = scmp.eq.s32.totalorder %s19, 0
      %p34 = por %p32, %p33
      %p35 = scmp.ne.s32.totalorder %s27, %s29
      %p36 = scmp.eq.s32.totalorder %s24, 1
      %p37 = por %p35, %p36
      %p38 = scmp.ne.s32.totalorder %s29, %s30
      %p39 = scmp.eq.s32.totalorder %s24, 0
      %p40 = por %p38, %p39
      %p41 = scmp.ne.s32.totalorder %s29, %s30
      %p42 = scmp.eq.s32.totalorder %s25, 1
      %p43 = por %p41, %p42
      %p45 = scmp.ne.s32.totalorder %s30, %s44
      %p46 = scmp.eq.s32.totalorder %s25, 0
      %p47 = por %p45, %p46
      %s49 = sadd.s32 %s48, 1
      %p52 = scmp.eq.s32.totalorder %s19, 1
      %p53 = scmp.ne.s32.totalorder %s48, %s50
      %p54 = scmp.eq.s32.totalorder %s19, 0
      %p55 = por %p53, %p54
      %p56 = scmp.ne.s32.totalorder %s48, %s50
      %p57 = scmp.eq.s32.totalorder %s24, 1
      %p58 = por %p56, %p57
      %p59 = scmp.ne.s32.totalorder %s50, %s51
      %p60 = scmp.eq.s32.totalorder %s24, 0
      %p61 = por %p59, %p60
      %p62 = scmp.ne.s32.totalorder %s50, %s51
      %p63 = scmp.eq.s32.totalorder %s25, 1
      %p64 = por %p62, %p63
      %p66 = scmp.ne.s32.totalorder %s51, %s65
      %p67 = scmp.eq.s32.totalorder %s25, 0
      %p68 = por %p66, %p67
      %s69 = ssub.s32 %s19, %s26
      %p70 = scmp.eq.s32.totalorder %s69, 0
      %s72 = sadd.s32 %s71, 1
      %s73 = scalar_select %p70, %s71, %s72
      %p76 = pneg %p70
      %p77 = scmp.eq.s32.totalorder %s19, 1
      %p78 = por %p76, %p77
      %p79 = scmp.ne.s32.totalorder %s71, %s74
      %p80 = scmp.eq.s32.totalorder %s19, 0
      %p81 = por %p79, %p80
      %p82 = scmp.ne.s32.totalorder %s71, %s74
      %p83 = scmp.eq.s32.totalorder %s24, 1
      %p84 = por %p82, %p83
      %p85 = scmp.ne.s32.totalorder %s74, %s75
      %p86 = scmp.eq.s32.totalorder %s24, 0
      %p87 = por %p85, %p86
      %p88 = scmp.ne.s32.totalorder %s74, %s75
      %p89 = scmp.eq.s32.totalorder %s25, 1
      %p90 = por %p88, %p89
      %p92 = scmp.ne.s32.totalorder %s75, %s91
      %p93 = scmp.eq.s32.totalorder %s25, 0
      %p94 = por %p92, %p93
      %s95 = ssub.s32 %s19, %s26
      %p96 = scmp.eq.s32.totalorder %s95, 0
      %s98 = sadd.s32 %s97, 1
      %s99 = scalar_select %p96, %s97, %s98
      %p102 = pneg %p96
      %p103 = scmp.eq.s32.totalorder %s19, 1
      %p104 = por %p102, %p103
      %p105 = scmp.ne.s32.totalorder %s97, %s100
      %p106 = scmp.eq.s32.totalorder %s19, 0
      %p107 = por %p105, %p106
      %p108 = scmp.ne.s32.totalorder %s97, %s100
      %p109 = scmp.eq.s32.totalorder %s24, 1
      %p110 = por %p108, %p109
      %p111 = scmp.ne.s32.totalorder %s100, %s101
      %p112 = scmp.eq.s32.totalorder %s24, 0
      %p113 = por %p111, %p112
      %p114 = scmp.ne.s32.totalorder %s100, %s101
      %p115 = scmp.eq.s32.totalorder %s25, 1
      %p116 = por %p114, %p115
      %p118 = scmp.ne.s32.totalorder %s101, %s117
      %p119 = scmp.eq.s32.totalorder %s25, 0
      %p120 = por %p118, %p119
      %s121 = ssub.s32 %s19, %s26
      %p122 = scmp.eq.s32.totalorder %s121, 0
      %s124 = sadd.s32 %s123, 1
      %s125 = scalar_select %p122, %s123, %s124
      %p128 = pneg %p122
      %p129 = scmp.eq.s32.totalorder %s19, 1
      %p130 = por %p128, %p129
      %p131 = scmp.ne.s32.totalorder %s123, %s126
      %p132 = scmp.eq.s32.totalorder %s19, 0
      %p133 = por %p131, %p132
      %p134 = scmp.ne.s32.totalorder %s123, %s126
      %p135 = scmp.eq.s32.totalorder %s24, 1
      %p136 = por %p134, %p135
      %p137 = scmp.ne.s32.totalorder %s126, %s127
      %p138 = scmp.eq.s32.totalorder %s24, 0
      %p139 = por %p137, %p138
      %p140 = scmp.ne.s32.totalorder %s126, %s127
      %p141 = scmp.eq.s32.totalorder %s25, 1
      %p142 = por %p140, %p141
      %p144 = scmp.ne.s32.totalorder %s127, %s143
      %p145 = scmp.eq.s32.totalorder %s25, 0
      %p146 = por %p144, %p145
      %s147 = ssub.s32 %s19, %s26
      %p148 = scmp.eq.s32.totalorder %s147, 0
      %s150 = sadd.s32 %s149, 1
      %s151 = scalar_select %p148, %s149, %s150
      %p154 = pneg %p148
      %p155 = scmp.eq.s32.totalorder %s19, 1
      %p156 = por %p154, %p155
      %p157 = scmp.ne.s32.totalorder %s149, %s152
      %p158 = scmp.eq.s32.totalorder %s19, 0
      %p159 = por %p157, %p158
      %p160 = scmp.ne.s32.totalorder %s149, %s152
      %p161 = scmp.eq.s32.totalorder %s24, 1
      %p162 = por %p160, %p161
      %p163 = scmp.ne.s32.totalorder %s152, %s153
      %p164 = scmp.eq.s32.totalorder %s24, 0
      %p165 = por %p163, %p164
      %p166 = scmp.ne.s32.totalorder %s152, %s153
      %p167 = scmp.eq.s32.totalorder %s25, 1
      %p168 = por %p166, %p167
      %p170 = scmp.ne.s32.totalorder %s153, %s169
      %p171 = scmp.eq.s32.totalorder %s25, 0
      %p172 = por %p170, %p171
      %s173 = ssub.s32 %s19, %s26
      %p174 = scmp.eq.s32.totalorder %s173, 0
      %s176 = sadd.s32 %s175, 1
      %s177 = scalar_select %p174, %s175, %s176
      %p180 = pneg %p174
      %p181 = scmp.eq.s32.totalorder %s19, 1
      %p182 = por %p180, %p181
      %p183 = scmp.ne.s32.totalorder %s175, %s178
      %p184 = scmp.eq.s32.totalorder %s19, 0
      %p185 = por %p183, %p184
      %p186 = scmp.ne.s32.totalorder %s175, %s178
      %p187 = scmp.eq.s32.totalorder %s24, 1
      %p188 = por %p186, %p187
      %p189 = scmp.ne.s32.totalorder %s178, %s179
      %p190 = scmp.eq.s32.totalorder %s24, 0
      %p191 = por %p189, %p190
      %p192 = scmp.ne.s32.totalorder %s178, %s179
      %p193 = scmp.eq.s32.totalorder %s25, 1
      %p194 = por %p192, %p193
      %p196 = scmp.ne.s32.totalorder %s179, %s195
      %p197 = scmp.eq.s32.totalorder %s25, 0
      %p198 = por %p196, %p197
      %s199 = ssub.s32 %s19, %s26
      %p200 = scmp.eq.s32.totalorder %s199, 0
      %s202 = sadd.s32 %s201, 1
      %s203 = scalar_select %p200, %s201, %s202
      %p206 = pneg %p200
      %p207 = scmp.eq.s32.totalorder %s19, 1
      %p208 = por %p206, %p207
      %p209 = scmp.ne.s32.totalorder %s201, %s204
      %p210 = scmp.eq.s32.totalorder %s19, 0
      %p211 = por %p209, %p210
      %p212 = scmp.ne.s32.totalorder %s201, %s204
      %p213 = scmp.eq.s32.totalorder %s24, 1
      %p214 = por %p212, %p213
      %p215 = scmp.ne.s32.totalorder %s204, %s205
      %p216 = scmp.eq.s32.totalorder %s24, 0
      %p217 = por %p215, %p216
      %p218 = scmp.ne.s32.totalorder %s204, %s205
      %p219 = scmp.eq.s32.totalorder %s25, 1
      %p220 = por %p218, %p219
      %p222 = scmp.ne.s32.totalorder %s205, %s221
      %p223 = scmp.eq.s32.totalorder %s25, 0
      %p224 = por %p222, %p223
      %s225 = ssub.s32 %s19, %s26
      %p226 = scmp.eq.s32.totalorder %s225, 0
      %s228 = sadd.s32 %s227, 1
      %s229 = scalar_select %p226, %s227, %s228
      %p232 = pneg %p226
      %p233 = scmp.eq.s32.totalorder %s19, 1
      %p234 = por %p232, %p233
      %p235 = scmp.ne.s32.totalorder %s227, %s230
      %p236 = scmp.eq.s32.totalorder %s19, 0
      %p237 = por %p235, %p236
      %p238 = scmp.ne.s32.totalorder %s227, %s230
      %p239 = scmp.eq.s32.totalorder %s24, 1
      %p240 = por %p238, %p239
      %p241 = scmp.ne.s32.totalorder %s230, %s231
      %p242 = scmp.eq.s32.totalorder %s24, 0
      %p243 = por %p241, %p242
      %p244 = scmp.ne.s32.totalorder %s230, %s231
      %p245 = scmp.eq.s32.totalorder %s25, 1
      %p246 = por %p244, %p245
      %p248 = scmp.ne.s32.totalorder %s231, %s247
      %p249 = scmp.eq.s32.totalorder %s25, 0
      %p250 = por %p248, %p249
      %s251 = ssub.s32 %s19, %s26
      %p252 = scmp.eq.s32.totalorder %s251, 0
      %s254 = sadd.s32 %s253, 1
      %s255 = scalar_select %p252, %s253, %s254
      %p258 = pneg %p252
      %p259 = scmp.eq.s32.totalorder %s19, 1
      %p260 = por %p258, %p259
      %p261 = scmp.ne.s32.totalorder %s253, %s256
      %p262 = scmp.eq.s32.totalorder %s19, 0
      %p263 = por %p261, %p262
      %p264 = scmp.ne.s32.totalorder %s253, %s256
      %p265 = scmp.eq.s32.totalorder %s24, 1
      %p266 = por %p264, %p265
      %p267 = scmp.ne.s32.totalorder %s256, %s257
      %p268 = scmp.eq.s32.totalorder %s24, 0
      %p269 = por %p267, %p268
      %p270 = scmp.ne.s32.totalorder %s256, %s257
      %p271 = scmp.eq.s32.totalorder %s25, 1
      %p272 = por %p270, %p271
      %p274 = scmp.ne.s32.totalorder %s257, %s273
      %p275 = scmp.eq.s32.totalorder %s25, 0
      %p276 = por %p274, %p275
      %s277 = ssub.s32 %s19, %s26
      %p278 = scmp.eq.s32.totalorder %s277, 0
      %s280 = sadd.s32 %s279, 1
      %s281 = scalar_select %p278, %s279, %s280
      %p284 = pneg %p278
      %p285 = scmp.eq.s32.totalorder %s19, 1
      %p286 = por %p284, %p285
      %p287 = scmp.ne.s32.totalorder %s279, %s282
      %p288 = scmp.eq.s32.totalorder %s19, 0
      %p289 = por %p287, %p288
      %p290 = scmp.ne.s32.totalorder %s279, %s282
      %p291 = scmp.eq.s32.totalorder %s24, 1
      %p292 = por %p290, %p291
      %p293 = scmp.ne.s32.totalorder %s282, %s283
      %p294 = scmp.eq.s32.totalorder %s24, 0
      %p295 = por %p293, %p294
      %p296 = scmp.ne.s32.totalorder %s282, %s283
      %p297 = scmp.eq.s32.totalorder %s25, 1
      %p298 = por %p296, %p297
      %p300 = scmp.ne.s32.totalorder %s283, %s299
      %p301 = scmp.eq.s32.totalorder %s25, 0
      %p302 = por %p300, %p301
      %s304 = sadd.s32 %s303, 1
      %p307 = scmp.eq.s32.totalorder %s19, 1
      %p308 = scmp.ne.s32.totalorder %s303, %s305
      %p309 = scmp.eq.s32.totalorder %s19, 0
      %p310 = por %p308, %p309
      %p311 = scmp.ne.s32.totalorder %s303, %s305
      %p312 = scmp.eq.s32.totalorder %s24, 1
      %p313 = por %p311, %p312
      %p314 = scmp.ne.s32.totalorder %s305, %s306
      %p315 = scmp.eq.s32.totalorder %s24, 0
      %p316 = por %p314, %p315
      %p317 = scmp.ne.s32.totalorder %s305, %s306
      %p318 = scmp.eq.s32.totalorder %s25, 1
      %p319 = por %p317, %p318
      %p321 = scmp.ne.s32.totalorder %s306, %s320
      %p322 = scmp.eq.s32.totalorder %s25, 0
      %p323 = por %p321, %p322
      %s325 = sadd.s32 %s324, 1
      %p328 = scmp.eq.s32.totalorder %s19, 1
      %p329 = scmp.ne.s32.totalorder %s324, %s326
      %p330 = scmp.eq.s32.totalorder %s19, 0
      %p331 = por %p329, %p330
      %p332 = scmp.ne.s32.totalorder %s324, %s326
      %p333 = scmp.eq.s32.totalorder %s24, 1
      %p334 = por %p332, %p333
      %p335 = scmp.ne.s32.totalorder %s326, %s327
      %p336 = scmp.eq.s32.totalorder %s24, 0
      %p337 = por %p335, %p336
      %p338 = scmp.ne.s32.totalorder %s326, %s327
      %p339 = scmp.eq.s32.totalorder %s25, 1
      %p340 = por %p338, %p339
      %p342 = scmp.ne.s32.totalorder %s327, %s341
      %p343 = scmp.eq.s32.totalorder %s25, 0
      %p344 = por %p342, %p343
      %p345 = scmp.le.s32.totalorder 1, %s19
      %p346 = scmp.lt.s32.totalorder %s19, 3
      %p347 = pnand %p345, %p346
      %p348 = pneg %p347
      // Predicated region
      $region9: #{baichuan_forward.1} parent=5 // pred_check
        _
      $region10: #{baichuan_forward.1} parent=5 // pred_check_branch
        %350 = sbr.rel (%p347) target = $region12
      $region11: #{baichuan_forward.1} parent=5 // pred_region
        %s351 = ssub.s32 %s19, 1
        // Predicated region
        $region13: #{baichuan_forward.1} parent=11 // pred_check
          %p352 = pneg %p40
        $region14: #{baichuan_forward.1} parent=11 // pred_check_branch
          %354 = sbr.rel (%p352) target = $region16
        $region15: #{baichuan_forward.1} parent=11 // pred_region
          _
        $region16: #{baichuan_forward.1} parent=11 // pred_fallthru
          _
        // Predicated region
        $region17: #{baichuan_forward.1} parent=11 // pred_check
          %p355 = pneg %p61
        $region18: #{baichuan_forward.1} parent=11 // pred_check_branch
          %357 = sbr.rel (%p355) target = $region20
        $region19: #{baichuan_forward.1} parent=11 // pred_region
          _
        $region20: #{baichuan_forward.1} parent=11 // pred_fallthru
          _
        // Predicated region
        $region21: #{baichuan_forward.1} parent=11 // pred_check
          %p358 = pneg %p316
        $region22: #{baichuan_forward.1} parent=11 // pred_check_branch
          %360 = sbr.rel (%p358) target = $region24
        $region23: #{baichuan_forward.1} parent=11 // pred_region
          _
        $region24: #{baichuan_forward.1} parent=11 // pred_fallthru
          _
      $region12: #{baichuan_forward.1} parent=5 // pred_fallthru
        _
      %p361 = scmp.lt.s32.totalorder %s19, 2
      // Predicated region
      $region25: #{baichuan_forward.1} parent=5 // pred_check
        %p362 = pneg %p361
      $region26: #{baichuan_forward.1} parent=5 // pred_check_branch
        %364 = sbr.rel (%p362) target = $region28
      $region27: #{baichuan_forward.1} parent=5 // pred_region
        // Predicated region
        $region29: #{baichuan_forward.1} parent=27 // pred_check
          %p365 = pneg %p81
        $region30: #{baichuan_forward.1} parent=27 // pred_check_branch
          %367 = sbr.rel (%p365) target = $region32
        $region31: #{baichuan_forward.1} parent=27 // pred_region
          %p368 = scmp.lt.s32.totalorder %s19, 1
          %s369 = scalar_select %p368, %s19, 1
          %s370 = scalar_lea.vmem %s2, %s369
        $region32: #{baichuan_forward.1} parent=27 // pred_fallthru
          _
        // Predicated region
        $region33: #{baichuan_forward.1} parent=27 // pred_check
          %p371 = pneg %p107
        $region34: #{baichuan_forward.1} parent=27 // pred_check_branch
          %373 = sbr.rel (%p371) target = $region36
        $region35: #{baichuan_forward.1} parent=27 // pred_region
          %p374 = scmp.lt.s32.totalorder %s19, 1
          %s375 = scalar_select %p374, %s19, 1
          %s376 = smul.addr %s375, 4
          %s377 = smul.addr %s376, 4
          %s378 = scalar_lea.vmem %s3, %s377
        $region36: #{baichuan_forward.1} parent=27 // pred_fallthru
          _
        // Predicated region
        $region37: #{baichuan_forward.1} parent=27 // pred_check
          %p379 = pneg %p133
        $region38: #{baichuan_forward.1} parent=27 // pred_check_branch
          %381 = sbr.rel (%p379) target = $region40
        $region39: #{baichuan_forward.1} parent=27 // pred_region
          %p382 = scmp.lt.s32.totalorder %s19, 1
          %s383 = scalar_select %p382, %s19, 1
          %s384 = smul.addr %s383, 4
          %s385 = smul.addr %s384, 4
          %s386 = scalar_lea.vmem %s4, %s385
        $region40: #{baichuan_forward.1} parent=27 // pred_fallthru
          _
        // Predicated region
        $region41: #{baichuan_forward.1} parent=27 // pred_check
          %p387 = pneg %p159
        $region42: #{baichuan_forward.1} parent=27 // pred_check_branch
          %389 = sbr.rel (%p387) target = $region44
        $region43: #{baichuan_forward.1} parent=27 // pred_region
          %p390 = scmp.lt.s32.totalorder %s19, 1
          %s391 = scalar_select %p390, %s19, 1
          %s392 = smul.addr %s391, 4
          %s393 = smul.addr %s392, 4
          %s394 = scalar_lea.vmem %s5, %s393
        $region44: #{baichuan_forward.1} parent=27 // pred_fallthru
          _
        // Predicated region
        $region45: #{baichuan_forward.1} parent=27 // pred_check
          %p395 = pneg %p185
        $region46: #{baichuan_forward.1} parent=27 // pred_check_branch
          %397 = sbr.rel (%p395) target = $region48
        $region47: #{baichuan_forward.1} parent=27 // pred_region
          %p398 = scmp.lt.s32.totalorder %s19, 1
          %s399 = scalar_select %p398, %s19, 1
          %s400 = smul.addr %s399, 4
          %s401 = smul.addr %s400, 4
          %s402 = scalar_lea.vmem %s6, %s401
        $region48: #{baichuan_forward.1} parent=27 // pred_fallthru
          _
        // Predicated region
        $region49: #{baichuan_forward.1} parent=27 // pred_check
          %p403 = pneg %p211
        $region50: #{baichuan_forward.1} parent=27 // pred_check_branch
          %405 = sbr.rel (%p403) target = $region52
        $region51: #{baichuan_forward.1} parent=27 // pred_region
          %p406 = scmp.lt.s32.totalorder %s19, 1
          %s407 = scalar_select %p406, %s19, 1
          %s408 = scalar_lea.vmem %s7, %s407
        $region52: #{baichuan_forward.1} parent=27 // pred_fallthru
          _
        // Predicated region
        $region53: #{baichuan_forward.1} parent=27 // pred_check
          %p409 = pneg %p237
        $region54: #{baichuan_forward.1} parent=27 // pred_check_branch
          %411 = sbr.rel (%p409) target = $region56
        $region55: #{baichuan_forward.1} parent=27 // pred_region
          %p412 = scmp.lt.s32.totalorder %s19, 1
          %s413 = scalar_select %p412, %s19, 1
          %s414 = smul.addr %s413, 4
          %s415 = smul.addr %s414, 4
          %s416 = scalar_lea.vmem %s8, %s415
        $region56: #{baichuan_forward.1} parent=27 // pred_fallthru
          _
        // Predicated region
        $region57: #{baichuan_forward.1} parent=27 // pred_check
          %p417 = pneg %p263
        $region58: #{baichuan_forward.1} parent=27 // pred_check_branch
          %419 = sbr.rel (%p417) target = $region60
        $region59: #{baichuan_forward.1} parent=27 // pred_region
          %p420 = scmp.lt.s32.totalorder %s19, 1
          %s421 = scalar_select %p420, %s19, 1
          %s422 = smul.addr %s421, 4
          %s423 = smul.addr %s422, 4
          %s424 = scalar_lea.vmem %s9, %s423
        $region60: #{baichuan_forward.1} parent=27 // pred_fallthru
          _
        // Predicated region
        $region61: #{baichuan_forward.1} parent=27 // pred_check
          %p425 = pneg %p289
        $region62: #{baichuan_forward.1} parent=27 // pred_check_branch
          %427 = sbr.rel (%p425) target = $region64
        $region63: #{baichuan_forward.1} parent=27 // pred_region
          %p428 = scmp.lt.s32.totalorder %s19, 1
          %s429 = scalar_select %p428, %s19, 1
          %s430 = smul.addr %s429, 8
          %s431 = smul.addr %s430, 4
          %s432 = scalar_lea.vmem %s10, %s431
        $region64: #{baichuan_forward.1} parent=27 // pred_fallthru
          _
      $region28: #{baichuan_forward.1} parent=5 // pred_fallthru
        _
      %p433 = scmp.le.s32.totalorder 1, %s19
      %p434 = scmp.lt.s32.totalorder %s19, 3
      %p435 = pnand %p433, %p434
      %p436 = pneg %p435
      // Predicated region
      $region65: #{baichuan_forward.1} parent=5 // pred_check
        _
      $region66: #{baichuan_forward.1} parent=5 // pred_check_branch
        %438 = sbr.rel (%p435) target = $region68
      $region67: #{baichuan_forward.1} parent=5 // pred_region
        %s439 = ssub.s32 %s19, 1
        %p440 = pneg %p40
        %p441 = pneg %p37
        %p442 = pneg %p61
        %p443 = pneg %p58
        %p444 = scmp.lt.s32.totalorder %s24, 1
        %s445 = scalar_select %p444, %s24, 1
        %s446 = scalar_lea.vmem %s2, %s445
        %p447 = pneg %p87
        %p448 = pneg %p84
        %p449 = scmp.lt.s32.totalorder %s24, 1
        %s450 = scalar_select %p449, %s24, 1
        %s451 = smul.addr %s450, 4
        %s452 = smul.addr %s451, 4
        %s453 = scalar_lea.vmem %s3, %s452
        %p454 = pneg %p113
        %p455 = pneg %p110
        %p456 = scmp.lt.s32.totalorder %s24, 1
        %s457 = scalar_select %p456, %s24, 1
        %s458 = smul.addr %s457, 4
        %s459 = smul.addr %s458, 4
        %s460 = scalar_lea.vmem %s4, %s459
        %p461 = pneg %p139
        %p462 = pneg %p136
        %p463 = scmp.lt.s32.totalorder %s24, 1
        %s464 = scalar_select %p463, %s24, 1
        %s465 = smul.addr %s464, 4
        %s466 = smul.addr %s465, 4
        %s467 = scalar_lea.vmem %s5, %s466
        %p468 = pneg %p165
        %p469 = pneg %p162
        %p470 = scmp.lt.s32.totalorder %s24, 1
        %s471 = scalar_select %p470, %s24, 1
        %s472 = smul.addr %s471, 4
        %s473 = smul.addr %s472, 4
        %s474 = scalar_lea.vmem %s6, %s473
        %p475 = pneg %p191
        %p476 = pneg %p188
        %p477 = scmp.lt.s32.totalorder %s24, 1
        %s478 = scalar_select %p477, %s24, 1
        %s479 = scalar_lea.vmem %s7, %s478
        %p480 = pneg %p217
        %p481 = pneg %p214
        %p482 = scmp.lt.s32.totalorder %s24, 1
        %s483 = scalar_select %p482, %s24, 1
        %s484 = smul.addr %s483, 4
        %s485 = smul.addr %s484, 4
        %s486 = scalar_lea.vmem %s8, %s485
        %p487 = pneg %p243
        %p488 = pneg %p240
        %p489 = scmp.lt.s32.totalorder %s24, 1
        %s490 = scalar_select %p489, %s24, 1
        %s491 = smul.addr %s490, 4
        %s492 = smul.addr %s491, 4
        %s493 = scalar_lea.vmem %s9, %s492
        %p494 = pneg %p269
        %p495 = pneg %p266
        %p496 = scmp.lt.s32.totalorder %s24, 1
        %s497 = scalar_select %p496, %s24, 1
        %s498 = smul.addr %s497, 8
        %s499 = smul.addr %s498, 4
        %s500 = scalar_lea.vmem %s10, %s499
        %p501 = pneg %p295
        %p502 = pneg %p292
        %p503 = pneg %p316
        %p504 = pneg %p313
        %p505 = pneg %p337
        %p506 = pneg %p334
        %p507 = scmp.lt.s32.totalorder %s24, 1
        %s508 = scalar_select %p507, %s24, 1
        %s509 = scalar_lea.vmem %s2, %s508
        %p510 = scmp.lt.s32.totalorder %s24, 1
        %s511 = scalar_select %p510, %s24, 1
        %s512 = smul.addr %s511, 4
        %s513 = smul.addr %s512, 4
        %s514 = scalar_lea.vmem %s3, %s513
        %p515 = scmp.lt.s32.totalorder %s24, 1
        %s516 = scalar_select %p515, %s24, 1
        %s517 = smul.addr %s516, 4
        %s518 = smul.addr %s517, 4
        %s519 = scalar_lea.vmem %s4, %s518
        %p520 = scmp.lt.s32.totalorder %s24, 1
        %s521 = scalar_select %p520, %s24, 1
        %s522 = smul.addr %s521, 4
        %s523 = smul.addr %s522, 4
        %s524 = scalar_lea.vmem %s5, %s523
        %p525 = scmp.lt.s32.totalorder %s24, 1
        %s526 = scalar_select %p525, %s24, 1
        %s527 = smul.addr %s526, 4
        %s528 = smul.addr %s527, 4
        %s529 = scalar_lea.vmem %s6, %s528
        %p530 = scmp.lt.s32.totalorder %s24, 1
        %s531 = scalar_select %p530, %s24, 1
        %s532 = scalar_lea.vmem %s7, %s531
        %p533 = scmp.lt.s32.totalorder %s24, 1
        %s534 = scalar_select %p533, %s24, 1
        %s535 = smul.addr %s534, 4
        %s536 = smul.addr %s535, 4
        %s537 = scalar_lea.vmem %s8, %s536
        %p538 = scmp.lt.s32.totalorder %s24, 1
        %s539 = scalar_select %p538, %s24, 1
        %s540 = smul.addr %s539, 4
        %s541 = smul.addr %s540, 4
        %s542 = scalar_lea.vmem %s9, %s541
        %p543 = scmp.lt.s32.totalorder %s24, 1
        %s544 = scalar_select %p543, %s24, 1
        %s545 = smul.addr %s544, 8
        %s546 = smul.addr %s545, 4
        %s547 = scalar_lea.vmem %s10, %s546
        %p549 = scmp.eq.s32.totalorder %s24, 0
        // Predicated region
        $region69: #{baichuan_forward.1} parent=67 // pred_check
          %p550 = pneg %p549
        $region70: #{baichuan_forward.1} parent=67 // pred_check_branch
          %552 = sbr.rel (%p550) target = $region72
        $region71: #{baichuan_forward.1} parent=67 // pred_region
          %v553 = vld [vmem:[%s0] sm:$0xff]
          %vm554 = vcmask 261120
          %555 = vst.msk [vmem:[#allocation2] sm:$0xff] %vm554, %v553
        $region72: #{baichuan_forward.1} parent=67 // pred_fallthru
          _
        %v556 = vld [vmem:[#allocation2] sm:$0xff]
        %v557 = vld [vmem:[%s509] sm:$0x1]
        %v558 = vmul.f32 %v556, %v556
        %vm559 = vcmask 261120
        %v560 = vsel %vm559, %v558, 0.0
        %561 = vadd.xlane.f32.xlu0 %v560
        %v562 = vpop.xlane.xlu0 %561
        %v563 = vrcp.pop 32.0
        %v564 = vmul.f32 %v562, %v563
        %v565 = vadd.f32 %v564, 1e-06
        %v566 = vrsqrt.pop %v565
        %v567 = vmul.f32 %v556, %v566
        %v569 = vlaneseq
        %v570 = vshrl.u32 %v569, 7
        %v571 = vsub.s32 0, %v570
        %v572 = vrot.slane %v557, %v571
        %v574 = vmul.f32 %v567, %v572
        %v575 = vpack.c.bf16 %v574, %v574
        %v576 = vld [vmem:[%s514] sm:$0xf]
        %v577 = vld [vmem:[%s514 + $0x4] sm:$0xf]
        %v578 = vld [vmem:[%s514 + $0x8] sm:$0xf]
        %v579 = vld [vmem:[%s514 + $0xc] sm:$0xf]
        %v584 = vunpack.c.l.b16 %v576
        %v585 = vunpack.c.l.b16 %v577
        %v586 = vunpack.c.l.b16 %v578
        %v587 = vunpack.c.l.b16 %v579
        %v588 = vpack.c.b16 %v585, %v584
        %v589 = vpack.c.b16 %v587, %v586
        %v593 = vsel %vm559, %v575, 0
        %595 = vmatprep.subr.bf16.mxu0 0
        %596 = vmatpush1.bf16.msra.mxu0 %v588
        %597 = vmatprep.subr.bf16.mxu0 0
        %598 = vmatpush1.bf16.msra.mxu0 %v589
        %599 = vmatprep.subr.bf16.mxu0 0
        %600 = vmatpush1.bf16.msra.mxu0 0
        %601 = vmatprep.subr.bf16.mxu0 0
        %602 = vmatpush1.bf16.msra.mxu0 0
        %603 = vmatprep.subr.bf16.mxu0 0
        %604 = vmatpush1.bf16.msra.mxu0 0
        %605 = vmatprep.subr.bf16.mxu0 0
        %606 = vmatpush1.bf16.msra.mxu0 0
        %607 = vmatprep.subr.bf16.mxu0 0
        %608 = vmatpush1.bf16.msra.mxu0 0
        %609 = vmatprep.subr.bf16.mxu0 0
        %610 = vmatpush1.bf16.msra.mxu0 0
        %611 = vmatprep.subr.bf16.mxu0 0
        %612 = vmatpush1.bf16.msra.mxu0 0
        %613 = vmatprep.subr.bf16.mxu0 0
        %614 = vmatpush1.bf16.msra.mxu0 0
        %615 = vmatprep.subr.bf16.mxu0 0
        %616 = vmatpush1.bf16.msra.mxu0 0
        %617 = vmatprep.subr.bf16.mxu0 0
        %618 = vmatpush1.bf16.msra.mxu0 0
        %619 = vmatprep.subr.bf16.mxu0 0
        %620 = vmatpush1.bf16.msra.mxu0 0
        %621 = vmatprep.subr.bf16.mxu0 0
        %622 = vmatpush1.bf16.msra.mxu0 0
        %623 = vmatprep.subr.bf16.mxu0 0
        %624 = vmatpush1.bf16.msra.mxu0 0
        %625 = vmatprep.subr.bf16.mxu0 0
        %626 = vmatpush1.bf16.msra.mxu0 0
        %627 = vmatprep.mubr.bf16.mxu0 0
        %628 = vmatmul.mubr.bf16.gmra.mrb[0].mxu0 %v593
        %v629 = vpop.f32.mrb[0].mxu0
        %v630 = vadd.f32 0.0, %v629
        %v631 = vpop.f32.mrb[0].mxu0
        %v632 = vpop.f32.mrb[0].mxu0
        %v633 = vpop.f32.mrb[0].mxu0
        %634 = vdwg.mxu0
        %v635 = vld [vmem:[%s519] sm:$0xf]
        %v636 = vld [vmem:[%s519 + $0x4] sm:$0xf]
        %v637 = vld [vmem:[%s519 + $0x8] sm:$0xf]
        %v638 = vld [vmem:[%s519 + $0xc] sm:$0xf]
        %v643 = vunpack.c.l.b16 %v635
        %v644 = vunpack.c.l.b16 %v636
        %v645 = vunpack.c.l.b16 %v637
        %v646 = vunpack.c.l.b16 %v638
        %v647 = vpack.c.b16 %v644, %v643
        %v648 = vpack.c.b16 %v646, %v645
        %651 = vmatprep.subr.bf16.mxu0 0
        %652 = vmatpush1.bf16.msra.mxu0 %v647
        %653 = vmatprep.subr.bf16.mxu0 0
        %654 = vmatpush1.bf16.msra.mxu0 %v648
        %655 = vmatprep.subr.bf16.mxu0 0
        %656 = vmatpush1.bf16.msra.mxu0 0
        %657 = vmatprep.subr.bf16.mxu0 0
        %658 = vmatpush1.bf16.msra.mxu0 0
        %659 = vmatprep.subr.bf16.mxu0 0
        %660 = vmatpush1.bf16.msra.mxu0 0
        %661 = vmatprep.subr.bf16.mxu0 0
        %662 = vmatpush1.bf16.msra.mxu0 0
        %663 = vmatprep.subr.bf16.mxu0 0
        %664 = vmatpush1.bf16.msra.mxu0 0
        %665 = vmatprep.subr.bf16.mxu0 0
        %666 = vmatpush1.bf16.msra.mxu0 0
        %667 = vmatprep.subr.bf16.mxu0 0
        %668 = vmatpush1.bf16.msra.mxu0 0
        %669 = vmatprep.subr.bf16.mxu0 0
        %670 = vmatpush1.bf16.msra.mxu0 0
        %671 = vmatprep.subr.bf16.mxu0 0
        %672 = vmatpush1.bf16.msra.mxu0 0
        %673 = vmatprep.subr.bf16.mxu0 0
        %674 = vmatpush1.bf16.msra.mxu0 0
        %675 = vmatprep.subr.bf16.mxu0 0
        %676 = vmatpush1.bf16.msra.mxu0 0
        %677 = vmatprep.subr.bf16.mxu0 0
        %678 = vmatpush1.bf16.msra.mxu0 0
        %679 = vmatprep.subr.bf16.mxu0 0
        %680 = vmatpush1.bf16.msra.mxu0 0
        %681 = vmatprep.subr.bf16.mxu0 0
        %682 = vmatpush1.bf16.msra.mxu0 0
        %683 = vmatprep.mubr.bf16.mxu0 0
        %684 = vmatmul.mubr.bf16.gmra.mrb[0].mxu0 %v593
        %v685 = vpop.f32.mrb[0].mxu0
        %v686 = vadd.f32 0.0, %v685
        %v687 = vpop.f32.mrb[0].mxu0
        %v688 = vpop.f32.mrb[0].mxu0
        %v689 = vpop.f32.mrb[0].mxu0
        %690 = vdwg.mxu0
        %v691 = vld [vmem:[%s524] sm:$0xf]
        %v692 = vld [vmem:[%s524 + $0x4] sm:$0xf]
        %v693 = vld [vmem:[%s524 + $0x8] sm:$0xf]
        %v694 = vld [vmem:[%s524 + $0xc] sm:$0xf]
        %v699 = vunpack.c.l.b16 %v691
        %v700 = vunpack.c.l.b16 %v692
        %v701 = vunpack.c.l.b16 %v693
        %v702 = vunpack.c.l.b16 %v694
        %v703 = vpack.c.b16 %v700, %v699
        %v704 = vpack.c.b16 %v702, %v701
        %707 = vmatprep.subr.bf16.mxu0 0
        %708 = vmatpush1.bf16.msra.mxu0 %v703
        %709 = vmatprep.subr.bf16.mxu0 0
        %710 = vmatpush1.bf16.msra.mxu0 %v704
        %711 = vmatprep.subr.bf16.mxu0 0
        %712 = vmatpush1.bf16.msra.mxu0 0
        %713 = vmatprep.subr.bf16.mxu0 0
        %714 = vmatpush1.bf16.msra.mxu0 0
        %715 = vmatprep.subr.bf16.mxu0 0
        %716 = vmatpush1.bf16.msra.mxu0 0
        %717 = vmatprep.subr.bf16.mxu0 0
        %718 = vmatpush1.bf16.msra.mxu0 0
        %719 = vmatprep.subr.bf16.mxu0 0
        %720 = vmatpush1.bf16.msra.mxu0 0
        %721 = vmatprep.subr.bf16.mxu0 0
        %722 = vmatpush1.bf16.msra.mxu0 0
        %723 = vmatprep.subr.bf16.mxu0 0
        %724 = vmatpush1.bf16.msra.mxu0 0
        %725 = vmatprep.subr.bf16.mxu0 0
        %726 = vmatpush1.bf16.msra.mxu0 0
        %727 = vmatprep.subr.bf16.mxu0 0
        %728 = vmatpush1.bf16.msra.mxu0 0
        %729 = vmatprep.subr.bf16.mxu0 0
        %730 = vmatpush1.bf16.msra.mxu0 0
        %731 = vmatprep.subr.bf16.mxu0 0
        %732 = vmatpush1.bf16.msra.mxu0 0
        %733 = vmatprep.subr.bf16.mxu0 0
        %734 = vmatpush1.bf16.msra.mxu0 0
        %735 = vmatprep.subr.bf16.mxu0 0
        %736 = vmatpush1.bf16.msra.mxu0 0
        %737 = vmatprep.subr.bf16.mxu0 0
        %738 = vmatpush1.bf16.msra.mxu0 0
        %739 = vmatprep.mubr.bf16.mxu0 0
        %740 = vmatmul.mubr.bf16.gmra.mrb[0].mxu0 %v593
        %v741 = vpop.f32.mrb[0].mxu0
        %v742 = vadd.f32 0.0, %v741
        %v743 = vpop.f32.mrb[0].mxu0
        %v744 = vpop.f32.mrb[0].mxu0
        %v745 = vpop.f32.mrb[0].mxu0
        %746 = vdwg.mxu0
        %v747 = vpack.c.bf16 %v630, %v630
        %v748 = vpack.c.bf16 %v686, %v686
        %v749 = vpack.c.bf16 %v742, %v742
        %vm750 = vcmask 64512
        %v752 = vsel %vm750, %v747, 0
        %v755 = vsel %vm750, %v748, 0
        %757 = vmatprep.subr.bf16.mxu0 0
        %758 = vmatpush1.bf16.xpose.msra.mxu0 %v755
        %759 = vmatprep.subr.bf16.mxu0 0
        %760 = vmatpush1.bf16.xpose.msra.mxu0 0
        %761 = vmatprep.subr.bf16.mxu0 0
        %762 = vmatpush1.bf16.xpose.msra.mxu0 0
        %763 = vmatprep.subr.bf16.mxu0 0
        %764 = vmatpush1.bf16.xpose.msra.mxu0 0
        %765 = vmatprep.subr.bf16.mxu0 0
        %766 = vmatpush1.bf16.xpose.msra.mxu0 0
        %767 = vmatprep.subr.bf16.mxu0 0
        %768 = vmatpush1.bf16.xpose.msra.mxu0 0
        %769 = vmatprep.subr.bf16.mxu0 0
        %770 = vmatpush1.bf16.xpose.msra.mxu0 0
        %771 = vmatprep.subr.bf16.mxu0 0
        %772 = vmatpush1.bf16.xpose.msra.mxu0 0
        %773 = vmatprep.subr.bf16.mxu0 0
        %774 = vmatpush1.bf16.xpose.msra.mxu0 0
        %775 = vmatprep.subr.bf16.mxu0 0
        %776 = vmatpush1.bf16.xpose.msra.mxu0 0
        %777 = vmatprep.subr.bf16.mxu0 0
        %778 = vmatpush1.bf16.xpose.msra.mxu0 0
        %779 = vmatprep.subr.bf16.mxu0 0
        %780 = vmatpush1.bf16.xpose.msra.mxu0 0
        %781 = vmatprep.subr.bf16.mxu0 0
        %782 = vmatpush1.bf16.xpose.msra.mxu0 0
        %783 = vmatprep.subr.bf16.mxu0 0
        %784 = vmatpush1.bf16.xpose.msra.mxu0 0
        %785 = vmatprep.subr.bf16.mxu0 0
        %786 = vmatpush1.bf16.xpose.msra.mxu0 0
        %787 = vmatprep.subr.bf16.mxu0 0
        %788 = vmatpush1.bf16.xpose.msra.mxu0 0
        %789 = vmatprep.mubr.bf16.mxu0 0
        %790 = vmatmul.mubr.bf16.gmra.mrb[0].mxu0 %v752
        %v791 = vpop.f32.mrb[0].mxu0
        %v792 = vadd.f32 0.0, %v791
        %v793 = vpop.f32.mrb[0].mxu0
        %v794 = vpop.f32.mrb[0].mxu0
        %v795 = vpop.f32.mrb[0].mxu0
        %796 = vdwg.mxu0
        %v797 = vmul.f32 %v792, 0.35355338
        %v798 = vld [vmem:[%s1] sm:$0xff]
        %v799 = vadd.f32 %v797, %v798
        %v800 = vsel %vm750, %v799, -inf
        %801 = vmax.xlane.f32.xlu0 %v800
        %v802 = vpop.xlane.xlu0 %801
        %v803 = vsub.f32 %v799, %v802
        %v804 = vmul.f32 %v803, 1.442695
        %v805 = vpow.pop %v804
        %v806 = vsel %vm750, %v805, 0.0
        %807 = vadd.xlane.f32.xlu0 %v806
        %v808 = vpop.xlane.xlu0 %807
        %v809 = vrcp.pop %v808
        %v810 = vmul.f32 %v805, %v809
        %v811 = vpack.c.bf16 %v810, %v810
        %v813 = vsel %vm750, %v811, 0
        %vm815 = vcmask 1043456
        %v817 = vsel %vm815, %v749, 0
        %819 = vmatprep.subr.bf16.mxu0 0
        %820 = vmatpush1.bf16.msra.mxu0 %v817
        %821 = vmatprep.subr.bf16.mxu0 0
        %822 = vmatpush1.bf16.msra.mxu0 0
        %823 = vmatprep.subr.bf16.mxu0 0
        %824 = vmatpush1.bf16.msra.mxu0 0
        %825 = vmatprep.subr.bf16.mxu0 0
        %826 = vmatpush1.bf16.msra.mxu0 0
        %827 = vmatprep.subr.bf16.mxu0 0
        %828 = vmatpush1.bf16.msra.mxu0 0
        %829 = vmatprep.subr.bf16.mxu0 0
        %830 = vmatpush1.bf16.msra.mxu0 0
        %831 = vmatprep.subr.bf16.mxu0 0
        %832 = vmatpush1.bf16.msra.mxu0 0
        %833 = vmatprep.subr.bf16.mxu0 0
        %834 = vmatpush1.bf16.msra.mxu0 0
        %835 = vmatprep.subr.bf16.mxu0 0
        %836 = vmatpush1.bf16.msra.mxu0 0
        %837 = vmatprep.subr.bf16.mxu0 0
        %838 = vmatpush1.bf16.msra.mxu0 0
        %839 = vmatprep.subr.bf16.mxu0 0
        %840 = vmatpush1.bf16.msra.mxu0 0
        %841 = vmatprep.subr.bf16.mxu0 0
        %842 = vmatpush1.bf16.msra.mxu0 0
        %843 = vmatprep.subr.bf16.mxu0 0
        %844 = vmatpush1.bf16.msra.mxu0 0
        %845 = vmatprep.subr.bf16.mxu0 0
        %846 = vmatpush1.bf16.msra.mxu0 0
        %847 = vmatprep.subr.bf16.mxu0 0
        %848 = vmatpush1.bf16.msra.mxu0 0
        %849 = vmatprep.subr.bf16.mxu0 0
        %850 = vmatpush1.bf16.msra.mxu0 0
        %851 = vmatprep.mubr.bf16.mxu0 0
        %852 = vmatmul.mubr.bf16.gmra.mrb[0].mxu0 %v813
        %v853 = vpop.f32.mrb[0].mxu0
        %v854 = vadd.f32 0.0, %v853
        %v855 = vpop.f32.mrb[0].mxu0
        %v856 = vpop.f32.mrb[0].mxu0
        %v857 = vpop.f32.mrb[0].mxu0
        %858 = vdwg.mxu0
        %860 = vrot.lane.b32.xlu0 %v747, 120
        %v861 = vpop.permute.xlu0 %860
        %863 = vrot.lane.b32.xlu0 %v748, 120
        %v864 = vpop.permute.xlu0 %863
        %v866 = vsel %vm750, %v861, 0
        %v869 = vsel %vm750, %v864, 0
        %871 = vmatprep.subr.bf16.mxu0 0
        %872 = vmatpush1.bf16.xpose.msra.mxu0 %v869
        %873 = vmatprep.subr.bf16.mxu0 0
        %874 = vmatpush1.bf16.xpose.msra.mxu0 0
        %875 = vmatprep.subr.bf16.mxu0 0
        %876 = vmatpush1.bf16.xpose.msra.mxu0 0
        %877 = vmatprep.subr.bf16.mxu0 0
        %878 = vmatpush1.bf16.xpose.msra.mxu0 0
        %879 = vmatprep.subr.bf16.mxu0 0
        %880 = vmatpush1.bf16.xpose.msra.mxu0 0
        %881 = vmatprep.subr.bf16.mxu0 0
        %882 = vmatpush1.bf16.xpose.msra.mxu0 0
        %883 = vmatprep.subr.bf16.mxu0 0
        %884 = vmatpush1.bf16.xpose.msra.mxu0 0
        %885 = vmatprep.subr.bf16.mxu0 0
        %886 = vmatpush1.bf16.xpose.msra.mxu0 0
        %887 = vmatprep.subr.bf16.mxu0 0
        %888 = vmatpush1.bf16.xpose.msra.mxu0 0
        %889 = vmatprep.subr.bf16.mxu0 0
        %890 = vmatpush1.bf16.xpose.msra.mxu0 0
        %891 = vmatprep.subr.bf16.mxu0 0
        %892 = vmatpush1.bf16.xpose.msra.mxu0 0
        %893 = vmatprep.subr.bf16.mxu0 0
        %894 = vmatpush1.bf16.xpose.msra.mxu0 0
        %895 = vmatprep.subr.bf16.mxu0 0
        %896 = vmatpush1.bf16.xpose.msra.mxu0 0
        %897 = vmatprep.subr.bf16.mxu0 0
        %898 = vmatpush1.bf16.xpose.msra.mxu0 0
        %899 = vmatprep.subr.bf16.mxu0 0
        %900 = vmatpush1.bf16.xpose.msra.mxu0 0
        %901 = vmatprep.subr.bf16.mxu0 0
        %902 = vmatpush1.bf16.xpose.msra.mxu0 0
        %903 = vmatprep.mubr.bf16.mxu0 0
        %904 = vmatmul.mubr.bf16.gmra.mrb[0].mxu0 %v866
        %v905 = vpop.f32.mrb[0].mxu0
        %v906 = vadd.f32 0.0, %v905
        %v907 = vpop.f32.mrb[0].mxu0
        %v908 = vpop.f32.mrb[0].mxu0
        %v909 = vpop.f32.mrb[0].mxu0
        %910 = vdwg.mxu0
        %v911 = vmul.f32 %v906, 0.35355338
        %s912 = scalar_lea.vmem %s1, 8
        %v913 = vld [vmem:[%s912] sm:$0xff]
        %v914 = vadd.f32 %v911, %v913
        %v915 = vsel %vm750, %v914, -inf
        %916 = vmax.xlane.f32.xlu0 %v915
        %v917 = vpop.xlane.xlu0 %916
        %v918 = vsub.f32 %v914, %v917
        %v919 = vmul.f32 %v918, 1.442695
        %v920 = vpow.pop %v919
        %v921 = vsel %vm750, %v920, 0.0
        %922 = vadd.xlane.f32.xlu0 %v921
        %v923 = vpop.xlane.xlu0 %922
        %v924 = vrcp.pop %v923
        %v925 = vmul.f32 %v920, %v924
        %v926 = vpack.c.bf16 %v925, %v925
        %928 = vrot.lane.b32.xlu0 %v749, 120
        %v929 = vpop.permute.xlu0 %928
        %v931 = vsel %vm750, %v926, 0
        %v934 = vsel %vm815, %v929, 0
        %936 = vmatprep.subr.bf16.mxu0 0
        %937 = vmatpush1.bf16.msra.mxu0 %v934
        %938 = vmatprep.subr.bf16.mxu0 0
        %939 = vmatpush1.bf16.msra.mxu0 0
        %940 = vmatprep.subr.bf16.mxu0 0
        %941 = vmatpush1.bf16.msra.mxu0 0
        %942 = vmatprep.subr.bf16.mxu0 0
        %943 = vmatpush1.bf16.msra.mxu0 0
        %944 = vmatprep.subr.bf16.mxu0 0
        %945 = vmatpush1.bf16.msra.mxu0 0
        %946 = vmatprep.subr.bf16.mxu0 0
        %947 = vmatpush1.bf16.msra.mxu0 0
        %948 = vmatprep.subr.bf16.mxu0 0
        %949 = vmatpush1.bf16.msra.mxu0 0
        %950 = vmatprep.subr.bf16.mxu0 0
        %951 = vmatpush1.bf16.msra.mxu0 0
        %952 = vmatprep.subr.bf16.mxu0 0
        %953 = vmatpush1.bf16.msra.mxu0 0
        %954 = vmatprep.subr.bf16.mxu0 0
        %955 = vmatpush1.bf16.msra.mxu0 0
        %956 = vmatprep.subr.bf16.mxu0 0
        %957 = vmatpush1.bf16.msra.mxu0 0
        %958 = vmatprep.subr.bf16.mxu0 0
        %959 = vmatpush1.bf16.msra.mxu0 0
        %960 = vmatprep.subr.bf16.mxu0 0
        %961 = vmatpush1.bf16.msra.mxu0 0
        %962 = vmatprep.subr.bf16.mxu0 0
        %963 = vmatpush1.bf16.msra.mxu0 0
        %964 = vmatprep.subr.bf16.mxu0 0
        %965 = vmatpush1.bf16.msra.mxu0 0
        %966 = vmatprep.subr.bf16.mxu0 0
        %967 = vmatpush1.bf16.msra.mxu0 0
        %968 = vmatprep.mubr.bf16.mxu0 0
        %969 = vmatmul.mubr.bf16.gmra.mrb[0].mxu0 %v931
        %v970 = vpop.f32.mrb[0].mxu0
        %v971 = vadd.f32 0.0, %v970
        %v972 = vpop.f32.mrb[0].mxu0
        %v973 = vpop.f32.mrb[0].mxu0
        %v974 = vpop.f32.mrb[0].mxu0
        %975 = vdwg.mxu0
        %976 = vrot.lane.b32.xlu0 %v747, 112
        %v977 = vpop.permute.xlu0 %976
        %978 = vrot.lane.b32.xlu0 %v748, 112
        %v979 = vpop.permute.xlu0 %978
        %v981 = vsel %vm750, %v977, 0
        %v984 = vsel %vm750, %v979, 0
        %986 = vmatprep.subr.bf16.mxu0 0
        %987 = vmatpush1.bf16.xpose.msra.mxu0 %v984
        %988 = vmatprep.subr.bf16.mxu0 0
        %989 = vmatpush1.bf16.xpose.msra.mxu0 0
        %990 = vmatprep.subr.bf16.mxu0 0
        %991 = vmatpush1.bf16.xpose.msra.mxu0 0
        %992 = vmatprep.subr.bf16.mxu0 0
        %993 = vmatpush1.bf16.xpose.msra.mxu0 0
        %994 = vmatprep.subr.bf16.mxu0 0
        %995 = vmatpush1.bf16.xpose.msra.mxu0 0
        %996 = vmatprep.subr.bf16.mxu0 0
        %997 = vmatpush1.bf16.xpose.msra.mxu0 0
        %998 = vmatprep.subr.bf16.mxu0 0
        %999 = vmatpush1.bf16.xpose.msra.mxu0 0
        %1000 = vmatprep.subr.bf16.mxu0 0
        %1001 = vmatpush1.bf16.xpose.msra.mxu0 0
        %1002 = vmatprep.subr.bf16.mxu0 0
        %1003 = vmatpush1.bf16.xpose.msra.mxu0 0
        %1004 = vmatprep.subr.bf16.mxu0 0
        %1005 = vmatpush1.bf16.xpose.msra.mxu0 0
        %1006 = vmatprep.subr.bf16.mxu0 0
        %1007 = vmatpush1.bf16.xpose.msra.mxu0 0
        %1008 = vmatprep.subr.bf16.mxu0 0
        %1009 = vmatpush1.bf16.xpose.msra.mxu0 0
        %1010 = vmatprep.subr.bf16.mxu0 0
        %1011 = vmatpush1.bf16.xpose.msra.mxu0 0
        %1012 = vmatprep.subr.bf16.mxu0 0
        %1013 = vmatpush1.bf16.xpose.msra.mxu0 0
        %1014 = vmatprep.subr.bf16.mxu0 0
        %1015 = vmatpush1.bf16.xpose.msra.mxu0 0
        %1016 = vmatprep.subr.bf16.mxu0 0
        %1017 = vmatpush1.bf16.xpose.msra.mxu0 0
        %1018 = vmatprep.mubr.bf16.mxu0 0
        %1019 = vmatmul.mubr.bf16.gmra.mrb[0].mxu0 %v981
        %v1020 = vpop.f32.mrb[0].mxu0
        %v1021 = vadd.f32 0.0, %v1020
        %v1022 = vpop.f32.mrb[0].mxu0
        %v1023 = vpop.f32.mrb[0].mxu0
        %v1024 = vpop.f32.mrb[0].mxu0
        %1025 = vdwg.mxu0
        %v1026 = vmul.f32 %v1021, 0.35355338
        %s1027 = scalar_lea.vmem %s1, 16
        %v1028 = vld [vmem:[%s1027] sm:$0xff]
        %v1029 = vadd.f32 %v1026, %v1028
        %v1030 = vsel %vm750, %v1029, -inf
        %1031 = vmax.xlane.f32.xlu0 %v1030
        %v1032 = vpop.xlane.xlu0 %1031
        %v1033 = vsub.f32 %v1029, %v1032
        %v1034 = vmul.f32 %v1033, 1.442695
        %v1035 = vpow.pop %v1034
        %v1036 = vsel %vm750, %v1035, 0.0
        %1037 = vadd.xlane.f32.xlu0 %v1036
        %v1038 = vpop.xlane.xlu0 %1037
        %v1039 = vrcp.pop %v1038
        %v1040 = vmul.f32 %v1035, %v1039
        %v1041 = vpack.c.bf16 %v1040, %v1040
        %1042 = vrot.lane.b32.xlu0 %v749, 112
        %v1043 = vpop.permute.xlu0 %1042
        %v1045 = vsel %vm750, %v1041, 0
        %v1048 = vsel %vm815, %v1043, 0
        %1050 = vmatprep.subr.bf16.mxu0 0
        %1051 = vmatpush1.bf16.msra.mxu0 %v1048
        %1052 = vmatprep.subr.bf16.mxu0 0
        %1053 = vmatpush1.bf16.msra.mxu0 0
        %1054 = vmatprep.subr.bf16.mxu0 0
        %1055 = vmatpush1.bf16.msra.mxu0 0
        %1056 = vmatprep.subr.bf16.mxu0 0
        %1057 = vmatpush1.bf16.msra.mxu0 0
        %1058 = vmatprep.subr.bf16.mxu0 0
        %1059 = vmatpush1.bf16.msra.mxu0 0
        %1060 = vmatprep.subr.bf16.mxu0 0
        %1061 = vmatpush1.bf16.msra.mxu0 0
        %1062 = vmatprep.subr.bf16.mxu0 0
        %1063 = vmatpush1.bf16.msra.mxu0 0
        %1064 = vmatprep.subr.bf16.mxu0 0
        %1065 = vmatpush1.bf16.msra.mxu0 0
        %1066 = vmatprep.subr.bf16.mxu0 0
        %1067 = vmatpush1.bf16.msra.mxu0 0
        %1068 = vmatprep.subr.bf16.mxu0 0
        %1069 = vmatpush1.bf16.msra.mxu0 0
        %1070 = vmatprep.subr.bf16.mxu0 0
        %1071 = vmatpush1.bf16.msra.mxu0 0
        %1072 = vmatprep.subr.bf16.mxu0 0
        %1073 = vmatpush1.bf16.msra.mxu0 0
        %1074 = vmatprep.subr.bf16.mxu0 0
        %1075 = vmatpush1.bf16.msra.mxu0 0
        %1076 = vmatprep.subr.bf16.mxu0 0
        %1077 = vmatpush1.bf16.msra.mxu0 0
        %1078 = vmatprep.subr.bf16.mxu0 0
        %1079 = vmatpush1.bf16.msra.mxu0 0
        %1080 = vmatprep.subr.bf16.mxu0 0
        %1081 = vmatpush1.bf16.msra.mxu0 0
        %1082 = vmatprep.mubr.bf16.mxu0 0
        %1083 = vmatmul.mubr.bf16.gmra.mrb[0].mxu0 %v1045
        %v1084 = vpop.f32.mrb[0].mxu0
        %v1085 = vadd.f32 0.0, %v1084
        %v1086 = vpop.f32.mrb[0].mxu0
        %v1087 = vpop.f32.mrb[0].mxu0
        %v1088 = vpop.f32.mrb[0].mxu0
        %1089 = vdwg.mxu0
        %1090 = vrot.lane.b32.xlu0 %v747, 104
        %v1091 = vpop.permute.xlu0 %1090
        %1092 = vrot.lane.b32.xlu0 %v748, 104
        %v1093 = vpop.permute.xlu0 %1092
        %v1095 = vsel %vm750, %v1091, 0
        %v1098 = vsel %vm750, %v1093, 0
        %1100 = vmatprep.subr.bf16.mxu0 0
        %1101 = vmatpush1.bf16.xpose.msra.mxu0 %v1098
        %1102 = vmatprep.subr.bf16.mxu0 0
        %1103 = vmatpush1.bf16.xpose.msra.mxu0 0
        %1104 = vmatprep.subr.bf16.mxu0 0
        %1105 = vmatpush1.bf16.xpose.msra.mxu0 0
        %1106 = vmatprep.subr.bf16.mxu0 0
        %1107 = vmatpush1.bf16.xpose.msra.mxu0 0
        %1108 = vmatprep.subr.bf16.mxu0 0
        %1109 = vmatpush1.bf16.xpose.msra.mxu0 0
        %1110 = vmatprep.subr.bf16.mxu0 0
        %1111 = vmatpush1.bf16.xpose.msra.mxu0 0
        %1112 = vmatprep.subr.bf16.mxu0 0
        %1113 = vmatpush1.bf16.xpose.msra.mxu0 0
        %1114 = vmatprep.subr.bf16.mxu0 0
        %1115 = vmatpush1.bf16.xpose.msra.mxu0 0
        %1116 = vmatprep.subr.bf16.mxu0 0
        %1117 = vmatpush1.bf16.xpose.msra.mxu0 0
        %1118 = vmatprep.subr.bf16.mxu0 0
        %1119 = vmatpush1.bf16.xpose.msra.mxu0 0
        %1120 = vmatprep.subr.bf16.mxu0 0
        %1121 = vmatpush1.bf16.xpose.msra.mxu0 0
        %1122 = vmatprep.subr.bf16.mxu0 0
        %1123 = vmatpush1.bf16.xpose.msra.mxu0 0
        %1124 = vmatprep.subr.bf16.mxu0 0
        %1125 = vmatpush1.bf16.xpose.msra.mxu0 0
        %1126 = vmatprep.subr.bf16.mxu0 0
        %1127 = vmatpush1.bf16.xpose.msra.mxu0 0
        %1128 = vmatprep.subr.bf16.mxu0 0
        %1129 = vmatpush1.bf16.xpose.msra.mxu0 0
        %1130 = vmatprep.subr.bf16.mxu0 0
        %1131 = vmatpush1.bf16.xpose.msra.mxu0 0
        %1132 = vmatprep.mubr.bf16.mxu0 0
        %1133 = vmatmul.mubr.bf16.gmra.mrb[0].mxu0 %v1095
        %v1134 = vpop.f32.mrb[0].mxu0
        %v1135 = vadd.f32 0.0, %v1134
        %v1136 = vpop.f32.mrb[0].mxu0
        %v1137 = vpop.f32.mrb[0].mxu0
        %v1138 = vpop.f32.mrb[0].mxu0
        %1139 = vdwg.mxu0
        %v1140 = vmul.f32 %v1135, 0.35355338
        %s1141 = scalar_lea.vmem %s1, 24
        %v1142 = vld [vmem:[%s1141] sm:$0xff]
        %v1143 = vadd.f32 %v1140, %v1142
        %v1144 = vsel %vm750, %v1143, -inf
        %1145 = vmax.xlane.f32.xlu0 %v1144
        %v1146 = vpop.xlane.xlu0 %1145
        %v1147 = vsub.f32 %v1143, %v1146
        %v1148 = vmul.f32 %v1147, 1.442695
        %v1149 = vpow.pop %v1148
        %v1150 = vsel %vm750, %v1149, 0.0
        %1151 = vadd.xlane.f32.xlu0 %v1150
        %v1152 = vpop.xlane.xlu0 %1151
        %v1153 = vrcp.pop %v1152
        %v1154 = vmul.f32 %v1149, %v1153
        %v1155 = vpack.c.bf16 %v1154, %v1154
        %1156 = vrot.lane.b32.xlu0 %v749, 104
        %v1157 = vpop.permute.xlu0 %1156
        %v1159 = vsel %vm750, %v1155, 0
        %v1162 = vsel %vm815, %v1157, 0
        %1164 = vmatprep.subr.bf16.mxu0 0
        %1165 = vmatpush1.bf16.msra.mxu0 %v1162
        %1166 = vmatprep.subr.bf16.mxu0 0
        %1167 = vmatpush1.bf16.msra.mxu0 0
        %1168 = vmatprep.subr.bf16.mxu0 0
        %1169 = vmatpush1.bf16.msra.mxu0 0
        %1170 = vmatprep.subr.bf16.mxu0 0
        %1171 = vmatpush1.bf16.msra.mxu0 0
        %1172 = vmatprep.subr.bf16.mxu0 0
        %1173 = vmatpush1.bf16.msra.mxu0 0
        %1174 = vmatprep.subr.bf16.mxu0 0
        %1175 = vmatpush1.bf16.msra.mxu0 0
        %1176 = vmatprep.subr.bf16.mxu0 0
        %1177 = vmatpush1.bf16.msra.mxu0 0
        %1178 = vmatprep.subr.bf16.mxu0 0
        %1179 = vmatpush1.bf16.msra.mxu0 0
        %1180 = vmatprep.subr.bf16.mxu0 0
        %1181 = vmatpush1.bf16.msra.mxu0 0
        %1182 = vmatprep.subr.bf16.mxu0 0
        %1183 = vmatpush1.bf16.msra.mxu0 0
        %1184 = vmatprep.subr.bf16.mxu0 0
        %1185 = vmatpush1.bf16.msra.mxu0 0
        %1186 = vmatprep.subr.bf16.mxu0 0
        %1187 = vmatpush1.bf16.msra.mxu0 0
        %1188 = vmatprep.subr.bf16.mxu0 0
        %1189 = vmatpush1.bf16.msra.mxu0 0
        %1190 = vmatprep.subr.bf16.mxu0 0
        %1191 = vmatpush1.bf16.msra.mxu0 0
        %1192 = vmatprep.subr.bf16.mxu0 0
        %1193 = vmatpush1.bf16.msra.mxu0 0
        %1194 = vmatprep.subr.bf16.mxu0 0
        %1195 = vmatpush1.bf16.msra.mxu0 0
        %1196 = vmatprep.mubr.bf16.mxu0 0
        %1197 = vmatmul.mubr.bf16.gmra.mrb[0].mxu0 %v1159
        %v1198 = vpop.f32.mrb[0].mxu0
        %v1199 = vadd.f32 0.0, %v1198
        %v1200 = vpop.f32.mrb[0].mxu0
        %v1201 = vpop.f32.mrb[0].mxu0
        %v1202 = vpop.f32.mrb[0].mxu0
        %1203 = vdwg.mxu0
        %1205 = vrot.lane.b32.xlu0 %v971, 8
        %v1206 = vpop.permute.xlu0 %1205
        %1209 = vrot.lane.b32.xlu0 %v1085, 16
        %v1210 = vpop.permute.xlu0 %1209
        %1213 = vrot.lane.b32.xlu0 %v1199, 24
        %v1214 = vpop.permute.xlu0 %1213
        %v1216 = vsel %vm750, %v854, %v1206
        %vm1217 = vcmask 130048
        %v1218 = vsel %vm1217, %v1216, %v1210
        %vm1219 = vcmask 195584
        %v1220 = vsel %vm1219, %v1218, %v1214
        %v1221 = vpack.c.bf16 %v1220, %v1220
        %v1222 = vld [vmem:[%s529] sm:$0xf]
        %v1223 = vld [vmem:[%s529 + $0x4] sm:$0xf]
        %v1224 = vld [vmem:[%s529 + $0x8] sm:$0xf]
        %v1225 = vld [vmem:[%s529 + $0xc] sm:$0xf]
        %v1230 = vunpack.c.l.b16 %v1222
        %v1231 = vunpack.c.l.b16 %v1223
        %v1232 = vunpack.c.l.b16 %v1224
        %v1233 = vunpack.c.l.b16 %v1225
        %v1234 = vpack.c.b16 %v1231, %v1230
        %v1235 = vpack.c.b16 %v1233, %v1232
        %v1239 = vsel %vm559, %v1221, 0
        %1241 = vmatprep.subr.bf16.mxu0 0
        %1242 = vmatpush1.bf16.msra.mxu0 %v1234
        %1243 = vmatprep.subr.bf16.mxu0 0
        %1244 = vmatpush1.bf16.msra.mxu0 %v1235
        %1245 = vmatprep.subr.bf16.mxu0 0
        %1246 = vmatpush1.bf16.msra.mxu0 0
        %1247 = vmatprep.subr.bf16.mxu0 0
        %1248 = vmatpush1.bf16.msra.mxu0 0
        %1249 = vmatprep.subr.bf16.mxu0 0
        %1250 = vmatpush1.bf16.msra.mxu0 0
        %1251 = vmatprep.subr.bf16.mxu0 0
        %1252 = vmatpush1.bf16.msra.mxu0 0
        %1253 = vmatprep.subr.bf16.mxu0 0
        %1254 = vmatpush1.bf16.msra.mxu0 0
        %1255 = vmatprep.subr.bf16.mxu0 0
        %1256 = vmatpush1.bf16.msra.mxu0 0
        %1257 = vmatprep.subr.bf16.mxu0 0
        %1258 = vmatpush1.bf16.msra.mxu0 0
        %1259 = vmatprep.subr.bf16.mxu0 0
        %1260 = vmatpush1.bf16.msra.mxu0 0
        %1261 = vmatprep.subr.bf16.mxu0 0
        %1262 = vmatpush1.bf16.msra.mxu0 0
        %1263 = vmatprep.subr.bf16.mxu0 0
        %1264 = vmatpush1.bf16.msra.mxu0 0
        %1265 = vmatprep.subr.bf16.mxu0 0
        %1266 = vmatpush1.bf16.msra.mxu0 0
        %1267 = vmatprep.subr.bf16.mxu0 0
        %1268 = vmatpush1.bf16.msra.mxu0 0
        %1269 = vmatprep.subr.bf16.mxu0 0
        %1270 = vmatpush1.bf16.msra.mxu0 0
        %1271 = vmatprep.subr.bf16.mxu0 0
        %1272 = vmatpush1.bf16.msra.mxu0 0
        %1273 = vmatprep.mubr.bf16.mxu0 0
        %1274 = vmatmul.mubr.bf16.gmra.mrb[0].mxu0 %v1239
        %v1275 = vpop.f32.mrb[0].mxu0
        %v1276 = vadd.f32 0.0, %v1275
        %v1277 = vpop.f32.mrb[0].mxu0
        %v1278 = vpop.f32.mrb[0].mxu0
        %v1279 = vpop.f32.mrb[0].mxu0
        %1280 = vdwg.mxu0
        %v1281 = vadd.f32 %v556, %v1276
        %v1282 = vld [vmem:[%s532] sm:$0x1]
        %v1283 = vmul.f32 %v1281, %v1281
        %v1284 = vsel %vm559, %v1283, 0.0
        %1285 = vadd.xlane.f32.xlu0 %v1284
        %v1286 = vpop.xlane.xlu0 %1285
        %v1287 = vmul.f32 %v1286, %v563
        %v1288 = vadd.f32 %v1287, 1e-06
        %v1289 = vrsqrt.pop %v1288
        %v1290 = vmul.f32 %v1281, %v1289
        %v1292 = vlaneseq
        %v1293 = vshrl.u32 %v1292, 7
        %v1294 = vsub.s32 0, %v1293
        %v1295 = vrot.slane %v1282, %v1294
        %v1297 = vmul.f32 %v1290, %v1295
        %v1298 = vpack.c.bf16 %v1297, %v1297
        %v1299 = vld [vmem:[%s537] sm:$0xf]
        %v1300 = vld [vmem:[%s537 + $0x4] sm:$0xf]
        %v1301 = vld [vmem:[%s537 + $0x8] sm:$0xf]
        %v1302 = vld [vmem:[%s537 + $0xc] sm:$0xf]
        %v1307 = vunpack.c.l.b16 %v1299
        %v1308 = vunpack.c.l.b16 %v1300
        %v1309 = vunpack.c.l.b16 %v1301
        %v1310 = vunpack.c.l.b16 %v1302
        %v1311 = vpack.c.b16 %v1308, %v1307
        %v1312 = vpack.c.b16 %v1310, %v1309
        %v1316 = vsel %vm559, %v1298, 0
        %1318 = vmatprep.subr.bf16.mxu0 0
        %1319 = vmatpush1.bf16.msra.mxu0 %v1311
        %1320 = vmatprep.subr.bf16.mxu0 0
        %1321 = vmatpush1.bf16.msra.mxu0 %v1312
        %1322 = vmatprep.subr.bf16.mxu0 0
        %1323 = vmatpush1.bf16.msra.mxu0 0
        %1324 = vmatprep.subr.bf16.mxu0 0
        %1325 = vmatpush1.bf16.msra.mxu0 0
        %1326 = vmatprep.subr.bf16.mxu0 0
        %1327 = vmatpush1.bf16.msra.mxu0 0
        %1328 = vmatprep.subr.bf16.mxu0 0
        %1329 = vmatpush1.bf16.msra.mxu0 0
        %1330 = vmatprep.subr.bf16.mxu0 0
        %1331 = vmatpush1.bf16.msra.mxu0 0
        %1332 = vmatprep.subr.bf16.mxu0 0
        %1333 = vmatpush1.bf16.msra.mxu0 0
        %1334 = vmatprep.subr.bf16.mxu0 0
        %1335 = vmatpush1.bf16.msra.mxu0 0
        %1336 = vmatprep.subr.bf16.mxu0 0
        %1337 = vmatpush1.bf16.msra.mxu0 0
        %1338 = vmatprep.subr.bf16.mxu0 0
        %1339 = vmatpush1.bf16.msra.mxu0 0
        %1340 = vmatprep.subr.bf16.mxu0 0
        %1341 = vmatpush1.bf16.msra.mxu0 0
        %1342 = vmatprep.subr.bf16.mxu0 0
        %1343 = vmatpush1.bf16.msra.mxu0 0
        %1344 = vmatprep.subr.bf16.mxu0 0
        %1345 = vmatpush1.bf16.msra.mxu0 0
        %1346 = vmatprep.subr.bf16.mxu0 0
        %1347 = vmatpush1.bf16.msra.mxu0 0
        %1348 = vmatprep.subr.bf16.mxu0 0
        %1349 = vmatpush1.bf16.msra.mxu0 0
        %1350 = vmatprep.mubr.bf16.mxu0 0
        %1351 = vmatmul.mubr.bf16.gmra.mrb[0].mxu0 %v1316
        %v1352 = vpop.f32.mrb[0].mxu0
        %v1353 = vadd.f32 0.0, %v1352
        %v1354 = vpop.f32.mrb[0].mxu0
        %v1355 = vpop.f32.mrb[0].mxu0
        %v1356 = vpop.f32.mrb[0].mxu0
        %1357 = vdwg.mxu0
        %v1358 = vld [vmem:[%s542] sm:$0xf]
        %v1359 = vld [vmem:[%s542 + $0x4] sm:$0xf]
        %v1360 = vld [vmem:[%s542 + $0x8] sm:$0xf]
        %v1361 = vld [vmem:[%s542 + $0xc] sm:$0xf]
        %v1366 = vunpack.c.l.b16 %v1358
        %v1367 = vunpack.c.l.b16 %v1359
        %v1368 = vunpack.c.l.b16 %v1360
        %v1369 = vunpack.c.l.b16 %v1361
        %v1370 = vpack.c.b16 %v1367, %v1366
        %v1371 = vpack.c.b16 %v1369, %v1368
        %1374 = vmatprep.subr.bf16.mxu0 0
        %1375 = vmatpush1.bf16.msra.mxu0 %v1370
        %1376 = vmatprep.subr.bf16.mxu0 0
        %1377 = vmatpush1.bf16.msra.mxu0 %v1371
        %1378 = vmatprep.subr.bf16.mxu0 0
        %1379 = vmatpush1.bf16.msra.mxu0 0
        %1380 = vmatprep.subr.bf16.mxu0 0
        %1381 = vmatpush1.bf16.msra.mxu0 0
        %1382 = vmatprep.subr.bf16.mxu0 0
        %1383 = vmatpush1.bf16.msra.mxu0 0
        %1384 = vmatprep.subr.bf16.mxu0 0
        %1385 = vmatpush1.bf16.msra.mxu0 0
        %1386 = vmatprep.subr.bf16.mxu0 0
        %1387 = vmatpush1.bf16.msra.mxu0 0
        %1388 = vmatprep.subr.bf16.mxu0 0
        %1389 = vmatpush1.bf16.msra.mxu0 0
        %1390 = vmatprep.subr.bf16.mxu0 0
        %1391 = vmatpush1.bf16.msra.mxu0 0
        %1392 = vmatprep.subr.bf16.mxu0 0
        %1393 = vmatpush1.bf16.msra.mxu0 0
        %1394 = vmatprep.subr.bf16.mxu0 0
        %1395 = vmatpush1.bf16.msra.mxu0 0
        %1396 = vmatprep.subr.bf16.mxu0 0
        %1397 = vmatpush1.bf16.msra.mxu0 0
        %1398 = vmatprep.subr.bf16.mxu0 0
        %1399 = vmatpush1.bf16.msra.mxu0 0
        %1400 = vmatprep.subr.bf16.mxu0 0
        %1401 = vmatpush1.bf16.msra.mxu0 0
        %1402 = vmatprep.subr.bf16.mxu0 0
        %1403 = vmatpush1.bf16.msra.mxu0 0
        %1404 = vmatprep.subr.bf16.mxu0 0
        %1405 = vmatpush1.bf16.msra.mxu0 0
        %1406 = vmatprep.mubr.bf16.mxu0 0
        %1407 = vmatmul.mubr.bf16.gmra.mrb[0].mxu0 %v1316
        %v1408 = vpop.f32.mrb[0].mxu0
        %v1409 = vadd.f32 0.0, %v1408
        %v1410 = vpop.f32.mrb[0].mxu0
        %v1411 = vpop.f32.mrb[0].mxu0
        %v1412 = vpop.f32.mrb[0].mxu0
        %1413 = vdwg.mxu0
        %v1414 = vxor.u32 %v1353, 2147483648
        %v1415 = vmul.f32 %v1414, 1.442695
        %v1416 = vpow.pop %v1415
        %v1417 = vadd.f32 %v1416, 1.0
        %v1418 = vrcp.pop %v1417
        %v1419 = vmul.f32 1.0, %v1418
        %v1420 = vmul.f32 %v1353, %v1419
        %v1421 = vmul.f32 %v1420, %v1409
        %v1422 = vpack.c.bf16 %v1421, %v1421
        %v1423 = vld [vmem:[%s547] sm:$0xf]
        %v1424 = vld [vmem:[%s547 + $0x4] sm:$0xf]
        %v1425 = vld [vmem:[%s547 + $0x8] sm:$0xf]
        %v1426 = vld [vmem:[%s547 + $0xc] sm:$0xf]
        %v1427 = vld [vmem:[%s547 + $0x10] sm:$0xf]
        %v1428 = vld [vmem:[%s547 + $0x14] sm:$0xf]
        %v1429 = vld [vmem:[%s547 + $0x18] sm:$0xf]
        %v1430 = vld [vmem:[%s547 + $0x1c] sm:$0xf]
        %v1439 = vunpack.c.l.b16 %v1423
        %v1440 = vunpack.c.l.b16 %v1424
        %v1441 = vunpack.c.l.b16 %v1425
        %v1442 = vunpack.c.l.b16 %v1426
        %v1443 = vunpack.c.l.b16 %v1427
        %v1444 = vunpack.c.l.b16 %v1428
        %v1445 = vunpack.c.l.b16 %v1429
        %v1446 = vunpack.c.l.b16 %v1430
        %v1447 = vpack.c.b16 %v1440, %v1439
        %v1448 = vpack.c.b16 %v1442, %v1441
        %v1449 = vpack.c.b16 %v1444, %v1443
        %v1450 = vpack.c.b16 %v1446, %v1445
        %vm1455 = vcmask 523264
        %v1457 = vsel %vm1455, %v1422, 0
        %1459 = vmatprep.subr.bf16.mxu0 0
        %1460 = vmatpush1.bf16.msra.mxu0 %v1447
        %1461 = vmatprep.subr.bf16.mxu0 0
        %1462 = vmatpush1.bf16.msra.mxu0 %v1448
        %1463 = vmatprep.subr.bf16.mxu0 0
        %1464 = vmatpush1.bf16.msra.mxu0 %v1449
        %1465 = vmatprep.subr.bf16.mxu0 0
        %1466 = vmatpush1.bf16.msra.mxu0 %v1450
        %1467 = vmatprep.subr.bf16.mxu0 0
        %1468 = vmatpush1.bf16.msra.mxu0 0
        %1469 = vmatprep.subr.bf16.mxu0 0
        %1470 = vmatpush1.bf16.msra.mxu0 0
        %1471 = vmatprep.subr.bf16.mxu0 0
        %1472 = vmatpush1.bf16.msra.mxu0 0
        %1473 = vmatprep.subr.bf16.mxu0 0
        %1474 = vmatpush1.bf16.msra.mxu0 0
        %1475 = vmatprep.subr.bf16.mxu0 0
        %1476 = vmatpush1.bf16.msra.mxu0 0
        %1477 = vmatprep.subr.bf16.mxu0 0
        %1478 = vmatpush1.bf16.msra.mxu0 0
        %1479 = vmatprep.subr.bf16.mxu0 0
        %1480 = vmatpush1.bf16.msra.mxu0 0
        %1481 = vmatprep.subr.bf16.mxu0 0
        %1482 = vmatpush1.bf16.msra.mxu0 0
        %1483 = vmatprep.subr.bf16.mxu0 0
        %1484 = vmatpush1.bf16.msra.mxu0 0
        %1485 = vmatprep.subr.bf16.mxu0 0
        %1486 = vmatpush1.bf16.msra.mxu0 0
        %1487 = vmatprep.subr.bf16.mxu0 0
        %1488 = vmatpush1.bf16.msra.mxu0 0
        %1489 = vmatprep.subr.bf16.mxu0 0
        %1490 = vmatpush1.bf16.msra.mxu0 0
        %1491 = vmatprep.mubr.bf16.mxu0 0
        %1492 = vmatmul.mubr.bf16.gmra.mrb[0].mxu0 %v1457
        %v1493 = vpop.f32.mrb[0].mxu0
        %v1494 = vadd.f32 0.0, %v1493
        %v1495 = vpop.f32.mrb[0].mxu0
        %v1496 = vpop.f32.mrb[0].mxu0
        %v1497 = vpop.f32.mrb[0].mxu0
        %1498 = vdwg.mxu0
        %v1499 = vadd.f32 %v1281, %v1494
        %1500 = vst.msk [vmem:[#allocation2] sm:$0xff] %vm559, %v1499
        %p1501 = scmp.eq.s32.totalorder %s24, 1
        // Predicated region
        $region73: #{baichuan_forward.1} parent=67 // pred_check
          %p1502 = pneg %p1501
        $region74: #{baichuan_forward.1} parent=67 // pred_check_branch
          %1504 = sbr.rel (%p1502) target = $region76
        $region75: #{baichuan_forward.1} parent=67 // pred_region
          %v1505 = vld [vmem:[#allocation2] sm:$0xff]
          %v1506 = vld [vmem:[%s11] sm:$0x1]
          %v1507 = vmul.f32 %v1505, %v1505
          %v1508 = vsel %vm559, %v1507, 0.0
          %1509 = vadd.xlane.f32.xlu0 %v1508
          %v1510 = vpop.xlane.xlu0 %1509
          %v1511 = vmul.f32 %v1510, %v563
          %v1512 = vadd.f32 %v1511, 1e-06
          %v1513 = vrsqrt.pop %v1512
          %v1514 = vmul.f32 %v1505, %v1513
          %v1516 = vlaneseq
          %v1517 = vshrl.u32 %v1516, 7
          %v1518 = vsub.s32 0, %v1517
          %v1519 = vrot.slane %v1506, %v1518
          %v1521 = vmul.f32 %v1514, %v1519
          %1522 = vst.msk [vmem:[#allocation2] sm:$0xff] %vm559, %v1521
        $region76: #{baichuan_forward.1} parent=67 // pred_fallthru
          _
        // Predicated region
        $region77: #{baichuan_forward.1} parent=67 // pred_check
          %p1523 = pneg %p334
        $region78: #{baichuan_forward.1} parent=67 // pred_check_branch
          %1525 = sbr.rel (%p1523) target = $region80
        $region79: #{baichuan_forward.1} parent=67 // pred_region
          %s1527 = ssub.s32 128, 128
          %1528 = vsyncadd [#allocation3], %s1527
          %s1530 = sshll.u32 [#allocation2], 4
          %s1531 = int_to_ptr.vmem [resolvable:$true] %s1530
          %1533 = dma.vmem_to_hbm [thread:$0]  %s1531, 128, %s12, [#allocation3]
        $region80: #{baichuan_forward.1} parent=67 // pred_fallthru
          _
        // Predicated region
        $region81: #{baichuan_forward.1} parent=67 // pred_check
          %p1534 = pneg %p334
        $region82: #{baichuan_forward.1} parent=67 // pred_check_branch
          %1536 = sbr.rel (%p1534) target = $region84
        $region83: #{baichuan_forward.1} parent=67 // pred_region
          %1537 = dma.done [#allocation3], 128
        $region84: #{baichuan_forward.1} parent=67 // pred_fallthru
          _
      $region68: #{baichuan_forward.1} parent=5 // pred_fallthru
        _
      %p1538 = scmp.le.s32.totalorder 2, %s19
      // Predicated region
      $region85: #{baichuan_forward.1} parent=5 // pred_check
        %p1539 = pneg %p1538
      $region86: #{baichuan_forward.1} parent=5 // pred_check_branch
        %1541 = sbr.rel (%p1539) target = $region88
      $region87: #{baichuan_forward.1} parent=5 // pred_region
        %s1542 = ssub.s32 %s19, 2
      $region88: #{baichuan_forward.1} parent=5 // pred_fallthru
        _
    $region6: #{baichuan_forward.1} parent=1 // loop_footer
      %s23 = sadd.s32 1, %s19
    $region7: #{baichuan_forward.1} parent=1 // loop_footer_branch
      %18 = sbr.rel target = $region3
    $region8: #{baichuan_forward.1} parent=1 // loop_exit
      _
    %1543 = vsyncpa [#allocation3], 1
    %s1544 = scalar_lea.sflag [#allocation3], 1
    %1545 = vsyncpa %s1544, 1

</llo_original>
